<compile_context>
chip_gen: v7x
topology: tpu7x:2x2x1
jax: 0.10.0
libtpu: 0.0.40
codegen_flags: <defaults>
</compile_context>

<pallas_src>
import math

import jax
import jax.numpy as jnp
from jax import lax
from jax.experimental import pallas as pl
from jax.experimental.pallas import tpu as pltpu


# --------------------------------------------------------------------------
# Pallas kernel: Tb timesteps of a single-layer LSTM (PyTorch gate order
# i, f, g, o) with the input projection already folded into `pre_gates`.
# --------------------------------------------------------------------------
def _lstm_block_kernel(pg_ref, whh_ref, h0_ref, c0_ref,
                       out_ref, hT_ref, cT_ref,
                       h_scr, c_scr):
    """Refs:
      pg_ref : (Tb, B, 4H) f32  pre-gates = x @ W_ih^T + (b_ih + b_hh)
      whh_ref: (H, 4H)          W_hh^T, resident in VMEM (constant index map)
      h0/c0  : (B, H) f32       initial hidden / cell state
      out_ref: (Tb, B, H)       hidden outputs (one slab writeback per block)
      hT/cT  : (B, H) f32       final hidden state (constant index map)
      h_scr/c_scr: (B, H) f32   recurrent carry, persists across grid steps
    """
    blk = pl.program_id(0)

    @pl.when(blk == 0)
    def _():
        # hidden_state is None on the first call -> caller passes zeros.
        h_scr[...] = h0_ref[...].astype(jnp.float32)
        c_scr[...] = c0_ref[...].astype(jnp.float32)

    H = h_scr.shape[-1]
    Tb = pg_ref.shape[0]
    whh = whh_ref[...]                 # loaded once per grid step

    def step(t, carry):
        h, c = carry
        # Only the h-dependent matmul sits on the recurrent critical path.
        gates = pg_ref[t] + jnp.dot(h.astype(whh.dtype), whh,
                                    preferred_element_type=jnp.float32)
        i_g = jax.nn.sigmoid(gates[:, 0 * H:1 * H])
        f_g = jax.nn.sigmoid(gates[:, 1 * H:2 * H])
        g_g = jnp.tanh(gates[:, 2 * H:3 * H])
        o_g = jax.nn.sigmoid(gates[:, 3 * H:4 * H])
        c_new = f_g * c + i_g * g_g
        h_new = o_g * jnp.tanh(c_new)
        out_ref[t] = h_new.astype(out_ref.dtype)
        return h_new, c_new

    # Fully unrolled inner time loop: amortizes per-grid-step overhead and
    # lets the scheduler overlap MXU / EUP / VPU work across timesteps.
    h_fin, c_fin = lax.fori_loop(0, Tb, step, (h_scr[...], c_scr[...]),
                                 unroll=True)
    h_scr[...] = h_fin
    c_scr[...] = c_fin
    # Constant index maps -> these blocks stay resident; the final HBM
    # writeback carries the last grid step's values (= state after step T).
    hT_ref[...] = h_fin.astype(hT_ref.dtype)
    cT_ref[...] = c_fin.astype(cT_ref.dtype)


def _pick_time_block(T, max_block=16):
    tb = min(T, max_block)
    while T % tb:
        tb -= 1
    return tb


def lstm_layer(x, w_ih_t, w_hh_t, bias, h0, c0, *,
               time_block=None, matmul_dtype=None):
    """Single-layer LSTM over x:(T,B,D) with initial state (h0,c0):(B,H).

    w_ih_t: (D, 4H)   transposed PyTorch weight_ih_l0
    w_hh_t: (H, 4H)   transposed PyTorch weight_hh_l0
    bias  : (4H,)     bias_ih_l0 + bias_hh_l0
    Returns (out:(T,B,H), h_T:(B,H), c_T:(B,H)).
    """
    T, B, D = x.shape
    H = w_hh_t.shape[0]
    assert w_ih_t.shape == (D, 4 * H) and w_hh_t.shape == (H, 4 * H)
    assert bias.shape == (4 * H,)
    mm_dtype = matmul_dtype if matmul_dtype is not None else x.dtype

    # ---- Hoisted input projection (off the recurrent critical path) -------
    pre_gates = jnp.einsum('tbd,dg->tbg',
                           x.astype(mm_dtype), w_ih_t.astype(mm_dtype),
                           preferred_element_type=jnp.float32)
    pre_gates = (pre_gates + bias.astype(jnp.float32)[None, None, :]
                 ).astype(jnp.float32)                      # (T, B, 4H)

    w_hh_k = w_hh_t.astype(mm_dtype)

    Tb = time_block if time_block is not None else _pick_time_block(T)
    assert T % Tb == 0
    grid = (T // Tb,)

    out, h_t, c_t = pl.pallas_call(
        _lstm_block_kernel,
        out_shape=(
            jax.ShapeDtypeStruct((T, B, H), x.dtype),
            jax.ShapeDtypeStruct((B, H), jnp.float32),
            jax.ShapeDtypeStruct((B, H), jnp.float32),
        ),
        grid_spec=pltpu.PrefetchScalarGridSpec(
            num_scalar_prefetch=0,
            grid=grid,
            in_specs=[
                pl.BlockSpec((Tb, B, 4 * H), lambda b: (b, 0, 0)),  # pre-gates
                pl.BlockSpec((H, 4 * H), lambda b: (0, 0)),         # W_hh^T (resident)
                pl.BlockSpec((B, H), lambda b: (0, 0)),             # h0
                pl.BlockSpec((B, H), lambda b: (0, 0)),             # c0
            ],
            out_specs=(
                pl.BlockSpec((Tb, B, H), lambda b: (b, 0, 0)),      # per-block out slab
                pl.BlockSpec((B, H), lambda b: (0, 0)),             # h_T
                pl.BlockSpec((B, H), lambda b: (0, 0)),             # c_T
            ),
            scratch_shapes=[
                pltpu.VMEM((B, H), jnp.float32),   # h carry
                pltpu.VMEM((B, H), jnp.float32),   # c carry
            ],
        ),
        compiler_params=pltpu.CompilerParams(
            dimension_semantics=("arbitrary",)),   # sequential recurrence over time blocks
    )(pre_gates, w_hh_k, h0, c0)
    return out, h_t, c_t


# --------------------------------------------------------------------------
# BasicUnit: faithful port of the PyTorch module (eval mode).
# --------------------------------------------------------------------------
class BasicUnit:
    def __init__(self, key, input_dim, increase_rate, droprate=0.0,
                 layer_drop=0.0, dtype=jnp.float32, matmul_dtype=None):
        self.unit = 'lstm'
        self.input_dim = input_dim
        self.increase_rate = increase_rate
        self.output_dim = input_dim + increase_rate
        self.droprate = droprate
        self.layer_drop = layer_drop
        self.matmul_dtype = matmul_dtype

        H = increase_rate
        bound = 1.0 / math.sqrt(H)
        k1, k2, k3, k4 = jax.random.split(key, 4)
        w_ih = jax.random.uniform(k1, (4 * H, input_dim), dtype, -bound, bound)
        w_hh = jax.random.uniform(k2, (4 * H, H), dtype, -bound, bound)
        b_ih = jax.random.uniform(k3, (4 * H,), dtype, -bound, bound)
        b_hh = jax.random.uniform(k4, (4 * H,), dtype, -bound, bound)
        self.w_ih_t = w_ih.T                     # (D, 4H)
        self.w_hh_t = w_hh.T                     # (H, 4H)
        self.bias = b_ih + b_hh                  # (4H,)
        self.init_hidden()

    def init_hidden(self):
        self.hidden_state = None

    def forward(self, x, p_out):
        # eval mode: F.dropout(training=False) is identity; layer_drop branch
        # only triggers during training.
        T, B, _ = x.shape
        H = self.increase_rate
        if self.hidden_state is None:
            h0 = jnp.zeros((B, H), jnp.float32)
            c0 = jnp.zeros((B, H), jnp.float32)
        else:
            h0, c0 = self.hidden_state
        out, h_t, c_t = lstm_layer(x, self.w_ih_t, self.w_hh_t, self.bias,
                                   h0, c0, matmul_dtype=self.matmul_dtype)
        # repackage_hidden: detach -> just store the values.
        self.hidden_state = (h_t, c_t)
        o_out = jnp.concatenate([p_out, out], axis=2)   # cat([p_out, out], 2)
        d_out = jnp.concatenate([x, out], axis=2)       # cat([x, out], 2)
        return d_out, o_out


# --------------------------------------------------------------------------
# Pure-JAX reference (lax.scan) for correctness checking.
# --------------------------------------------------------------------------
def _lstm_ref(x, w_ih_t, w_hh_t, bias, h0, c0):
    H = w_hh_t.shape[0]

    def step(carry, xt):
        h, c = carry
        gates = xt @ w_ih_t + h @ w_hh_t + bias
        i_g = jax.nn.sigmoid(gates[:, 0 * H:1 * H])
        f_g = jax.nn.sigmoid(gates[:, 1 * H:2 * H])
        g_g = jnp.tanh(gates[:, 2 * H:3 * H])
        o_g = jax.nn.sigmoid(gates[:, 3 * H:4 * H])
        c_new = f_g * c + i_g * g_g
        h_new = o_g * jnp.tanh(c_new)
        return (h_new, c_new), h_new

    (h_t, c_t), ys = lax.scan(step, (h0, c0), x)
    return ys, h_t, c_t


if __name__ == "__main__":
    input_dim = 32        # BasicUnit input_dim
    increase_rate = 32    # BasicUnit increase_rate (LSTM hidden size)
    seq_len = 8
    batch = 4

    key = jax.random.PRNGKey(0)
    key, kx, kp, ku = jax.random.split(key, 4)
    x = jax.random.normal(kx, (seq_len, batch, input_dim), dtype=jnp.float32)
    p_out = jax.random.normal(kp, (seq_len, batch, input_dim), dtype=jnp.float32)

    unit = BasicUnit(ku, input_dim, increase_rate, droprate=0.0)

    # --- kernel vs. pure-JAX reference (zero initial state) ---------------
    h0 = jnp.zeros((batch, increase_rate), jnp.float32)
    c0 = jnp.zeros((batch, increase_rate), jnp.float32)
    out_k, hT_k, cT_k = lstm_layer(x, unit.w_ih_t, unit.w_hh_t, unit.bias,
                                   h0, c0)
    out_r, hT_r, cT_r = _lstm_ref(x, unit.w_ih_t, unit.w_hh_t, unit.bias,
                                  h0, c0)
    out_k = jax.block_until_ready(out_k)
    max_diff = float(jnp.max(jnp.abs(out_k - out_r)))
    assert max_diff < 5e-3, f"LSTM kernel mismatch vs reference: {max_diff}"

    # --- BasicUnit forward -------------------------------------------------
    d_out, o_out = unit.forward(x, p_out)
    d_out, o_out = jax.block_until_ready((d_out, o_out))

    assert d_out.shape == (seq_len, batch, unit.output_dim), d_out.shape
    assert o_out.shape == (seq_len, batch, input_dim + increase_rate), o_out.shape
    assert d_out.dtype == jnp.float32 and o_out.dtype == jnp.float32
    assert bool(jnp.all(jnp.isfinite(d_out))) and bool(jnp.all(jnp.isfinite(o_out)))
    print("KERNEL_OK")
</pallas_src>

<mosaic_0001>
module attributes {stable_mosaic.version = 11 : i64} {
  func.func @_lstm_block_kernel(%arg0: i32, %arg1: memref<8x4x128xf32, #tpu.memory_space<vmem>>, %arg2: memref<32x128xf32, #tpu.memory_space<vmem>>, %arg3: memref<4x32xf32, #tpu.memory_space<vmem>>, %arg4: memref<4x32xf32, #tpu.memory_space<vmem>>, %arg5: memref<8x4x32xf32, #tpu.memory_space<vmem>>, %arg6: memref<4x32xf32, #tpu.memory_space<vmem>>, %arg7: memref<4x32xf32, #tpu.memory_space<vmem>>, %arg8: memref<4x32xf32, #tpu.memory_space<vmem>>, %arg9: memref<4x32xf32, #tpu.memory_space<vmem>>) attributes {dimension_semantics = [#tpu.dimension_semantics<arbitrary>], iteration_bounds = array<i64: 1>, scalar_prefetch = 0 : i64, scratch_operands = 2 : i64, tpu.core_type = #tpu.core_type<tc>, window_params = [{transform_indices = @transform_0, window_bounds = array<i64: 8, 4, 128>}, {pipeline_mode = #tpu.pipeline_mode<synchronous>, transform_indices = @transform_1, window_bounds = array<i64: 32, 128>}, {pipeline_mode = #tpu.pipeline_mode<synchronous>, transform_indices = @transform_2, window_bounds = array<i64: 4, 32>}, {pipeline_mode = #tpu.pipeline_mode<synchronous>, transform_indices = @transform_3, window_bounds = array<i64: 4, 32>}, {transform_indices = @transform_4, window_bounds = array<i64: 8, 4, 32>}, {pipeline_mode = #tpu.pipeline_mode<synchronous>, transform_indices = @transform_5, window_bounds = array<i64: 4, 32>}, {pipeline_mode = #tpu.pipeline_mode<synchronous>, transform_indices = @transform_6, window_bounds = array<i64: 4, 32>}]} {
    %c0_i32 = arith.constant 0 : i32
    %0 = arith.cmpi eq, %arg0, %c0_i32 : i32
    %1 = arith.extui %0 : i1 to i32
    %c0_i32_0 = arith.constant 0 : i32
    %2 = arith.cmpi ne, %1, %c0_i32_0 : i32
    scf.if %2 {
      %c0_78 = arith.constant 0 : index
      %c0_79 = arith.constant 0 : index
      %282 = vector.load %arg3[%c0_78, %c0_79] : memref<4x32xf32, #tpu.memory_space<vmem>>, vector<4x32xf32>
      %c0_80 = arith.constant 0 : index
      %c0_81 = arith.constant 0 : index
      %283 = vector.load %arg8[%c0_80, %c0_81] : memref<4x32xf32, #tpu.memory_space<vmem>>, vector<4x32xf32>
      tpu.vector_store %arg8[%c0_80, %c0_81], %282 {strides = array<i32>} : memref<4x32xf32, #tpu.memory_space<vmem>>, vector<4x32xf32>,
      %c0_82 = arith.constant 0 : index
      %c0_83 = arith.constant 0 : index
      %284 = vector.load %arg4[%c0_82, %c0_83] : memref<4x32xf32, #tpu.memory_space<vmem>>, vector<4x32xf32>
      %c0_84 = arith.constant 0 : index
      %c0_85 = arith.constant 0 : index
      %285 = vector.load %arg9[%c0_84, %c0_85] : memref<4x32xf32, #tpu.memory_space<vmem>>, vector<4x32xf32>
      tpu.vector_store %arg9[%c0_84, %c0_85], %284 {strides = array<i32>} : memref<4x32xf32, #tpu.memory_space<vmem>>, vector<4x32xf32>,
    } else {
    }
    %c0 = arith.constant 0 : index
    %c0_1 = arith.constant 0 : index
    %3 = vector.load %arg2[%c0, %c0_1] : memref<32x128xf32, #tpu.memory_space<vmem>>, vector<32x128xf32>
    %c0_2 = arith.constant 0 : index
    %c0_3 = arith.constant 0 : index
    %4 = vector.load %arg8[%c0_2, %c0_3] : memref<4x32xf32, #tpu.memory_space<vmem>>, vector<4x32xf32>
    %c0_4 = arith.constant 0 : index
    %c0_5 = arith.constant 0 : index
    %5 = vector.load %arg9[%c0_4, %c0_5] : memref<4x32xf32, #tpu.memory_space<vmem>>, vector<4x32xf32>
    %c0_i32_6 = arith.constant 0 : i32
    %6 = arith.index_cast %c0_i32_6 : i32 to index
    %c0_7 = arith.constant 0 : index
    %c0_8 = arith.constant 0 : index
    %7 = vector.load %arg1[%6, %c0_7, %c0_8] : memref<8x4x128xf32, #tpu.memory_space<vmem>>, vector<1x4x128xf32>
    %8 = vector.shape_cast %7 : vector<1x4x128xf32> to vector<4x128xf32>
    %cst = arith.constant dense<0.000000e+00> : vector<4x128xf32>
    %9 = tpu.matmul %4, %3, %cst {dimension_numbers = #tpu.dot_dimension_numbers<[1], [0], [0], [1], [0, 0, 1, 1], [], []>} : vector<4x32xf32>, vector<32x128xf32>, vector<4x128xf32> -> vector<4x128xf32>
    %10 = arith.addf %8, %9 : vector<4x128xf32>
    %11 = vector.extract_strided_slice %10 {offsets = [0, 0], sizes = [4, 32], strides = [1, 1]} : vector<4x128xf32> to vector<4x32xf32>
    %12 = arith.negf %11 : vector<4x32xf32>
    %13 = math.exp %12 : vector<4x32xf32>
    %cst_9 = arith.constant 1.000000e+00 : f32
    %14 = vector.broadcast %cst_9 : f32 to vector<4x32xf32>
    %15 = arith.addf %14, %13 : vector<4x32xf32>
    %16 = arith.divf %14, %15 : vector<4x32xf32>
    %17 = vector.extract_strided_slice %10 {offsets = [0, 32], sizes = [4, 32], strides = [1, 1]} : vector<4x128xf32> to vector<4x32xf32>
    %18 = arith.negf %17 : vector<4x32xf32>
    %19 = math.exp %18 : vector<4x32xf32>
    %cst_10 = arith.constant 1.000000e+00 : f32
    %20 = vector.broadcast %cst_10 : f32 to vector<4x32xf32>
    %21 = arith.addf %20, %19 : vector<4x32xf32>
    %22 = arith.divf %20, %21 : vector<4x32xf32>
    %23 = vector.extract_strided_slice %10 {offsets = [0, 64], sizes = [4, 32], strides = [1, 1]} : vector<4x128xf32> to vector<4x32xf32>
    %24 = math.tanh %23 : vector<4x32xf32>
    %25 = vector.extract_strided_slice %10 {offsets = [0, 96], sizes = [4, 32], strides = [1, 1]} : vector<4x128xf32> to vector<4x32xf32>
    %26 = arith.negf %25 : vector<4x32xf32>
    %27 = math.exp %26 : vector<4x32xf32>
    %cst_11 = arith.constant 1.000000e+00 : f32
    %28 = vector.broadcast %cst_11 : f32 to vector<4x32xf32>
    %29 = arith.addf %28, %27 : vector<4x32xf32>
    %30 = arith.divf %28, %29 : vector<4x32xf32>
    %31 = arith.mulf %22, %5 : vector<4x32xf32>
    %32 = arith.mulf %16, %24 : vector<4x32xf32>
    %33 = arith.addf %31, %32 : vector<4x32xf32>
    %34 = math.tanh %33 : vector<4x32xf32>
    %35 = arith.mulf %30, %34 : vector<4x32xf32>
    %36 = arith.index_cast %c0_i32_6 : i32 to index
    %c0_12 = arith.constant 0 : index
    %c0_13 = arith.constant 0 : index
    %37 = vector.load %arg5[%36, %c0_12, %c0_13] : memref<8x4x32xf32, #tpu.memory_space<vmem>>, vector<1x4x32xf32>
    %38 = vector.shape_cast %37 : vector<1x4x32xf32> to vector<4x32xf32>
    %39 = vector.shape_cast %35 : vector<4x32xf32> to vector<1x4x32xf32>
    tpu.vector_store %arg5[%36, %c0_12, %c0_13], %39 {strides = array<i32>} : memref<8x4x32xf32, #tpu.memory_space<vmem>>, vector<1x4x32xf32>,
    %c1_i32 = arith.constant 1 : i32
    %40 = arith.index_cast %c1_i32 : i32 to index
    %c0_14 = arith.constant 0 : index
    %c0_15 = arith.constant 0 : index
    %41 = vector.load %arg1[%40, %c0_14, %c0_15] : memref<8x4x128xf32, #tpu.memory_space<vmem>>, vector<1x4x128xf32>
    %42 = vector.shape_cast %41 : vector<1x4x128xf32> to vector<4x128xf32>
    %cst_16 = arith.constant dense<0.000000e+00> : vector<4x128xf32>
    %43 = tpu.matmul %35, %3, %cst_16 {dimension_numbers = #tpu.dot_dimension_numbers<[1], [0], [0], [1], [0, 0, 1, 1], [], []>} : vector<4x32xf32>, vector<32x128xf32>, vector<4x128xf32> -> vector<4x128xf32>
    %44 = arith.addf %42, %43 : vector<4x128xf32>
    %45 = vector.extract_strided_slice %44 {offsets = [0, 0], sizes = [4, 32], strides = [1, 1]} : vector<4x128xf32> to vector<4x32xf32>
    %46 = arith.negf %45 : vector<4x32xf32>
    %47 = math.exp %46 : vector<4x32xf32>
    %cst_17 = arith.constant 1.000000e+00 : f32
    %48 = vector.broadcast %cst_17 : f32 to vector<4x32xf32>
    %49 = arith.addf %48, %47 : vector<4x32xf32>
    %50 = arith.divf %48, %49 : vector<4x32xf32>
    %51 = vector.extract_strided_slice %44 {offsets = [0, 32], sizes = [4, 32], strides = [1, 1]} : vector<4x128xf32> to vector<4x32xf32>
    %52 = arith.negf %51 : vector<4x32xf32>
    %53 = math.exp %52 : vector<4x32xf32>
    %cst_18 = arith.constant 1.000000e+00 : f32
    %54 = vector.broadcast %cst_18 : f32 to vector<4x32xf32>
    %55 = arith.addf %54, %53 : vector<4x32xf32>
    %56 = arith.divf %54, %55 : vector<4x32xf32>
    %57 = vector.extract_strided_slice %44 {offsets = [0, 64], sizes = [4, 32], strides = [1, 1]} : vector<4x128xf32> to vector<4x32xf32>
    %58 = math.tanh %57 : vector<4x32xf32>
    %59 = vector.extract_strided_slice %44 {offsets = [0, 96], sizes = [4, 32], strides = [1, 1]} : vector<4x128xf32> to vector<4x32xf32>
    %60 = arith.negf %59 : vector<4x32xf32>
    %61 = math.exp %60 : vector<4x32xf32>
    %cst_19 = arith.constant 1.000000e+00 : f32
    %62 = vector.broadcast %cst_19 : f32 to vector<4x32xf32>
    %63 = arith.addf %62, %61 : vector<4x32xf32>
    %64 = arith.divf %62, %63 : vector<4x32xf32>
    %65 = arith.mulf %56, %33 : vector<4x32xf32>
    %66 = arith.mulf %50, %58 : vector<4x32xf32>
    %67 = arith.addf %65, %66 : vector<4x32xf32>
    %68 = math.tanh %67 : vector<4x32xf32>
    %69 = arith.mulf %64, %68 : vector<4x32xf32>
    %70 = arith.index_cast %c1_i32 : i32 to index
    %c0_20 = arith.constant 0 : index
    %c0_21 = arith.constant 0 : index
    %71 = vector.load %arg5[%70, %c0_20, %c0_21] : memref<8x4x32xf32, #tpu.memory_space<vmem>>, vector<1x4x32xf32>
    %72 = vector.shape_cast %71 : vector<1x4x32xf32> to vector<4x32xf32>
    %73 = vector.shape_cast %69 : vector<4x32xf32> to vector<1x4x32xf32>
    tpu.vector_store %arg5[%70, %c0_20, %c0_21], %73 {strides = array<i32>} : memref<8x4x32xf32, #tpu.memory_space<vmem>>, vector<1x4x32xf32>,
    %c2_i32 = arith.constant 2 : i32
    %74 = arith.index_cast %c2_i32 : i32 to index
    %c0_22 = arith.constant 0 : index
    %c0_23 = arith.constant 0 : index
    %75 = vector.load %arg1[%74, %c0_22, %c0_23] : memref<8x4x128xf32, #tpu.memory_space<vmem>>, vector<1x4x128xf32>
    %76 = vector.shape_cast %75 : vector<1x4x128xf32> to vector<4x128xf32>
    %cst_24 = arith.constant dense<0.000000e+00> : vector<4x128xf32>
    %77 = tpu.matmul %69, %3, %cst_24 {dimension_numbers = #tpu.dot_dimension_numbers<[1], [0], [0], [1], [0, 0, 1, 1], [], []>} : vector<4x32xf32>, vector<32x128xf32>, vector<4x128xf32> -> vector<4x128xf32>
    %78 = arith.addf %76, %77 : vector<4x128xf32>
    %79 = vector.extract_strided_slice %78 {offsets = [0, 0], sizes = [4, 32], strides = [1, 1]} : vector<4x128xf32> to vector<4x32xf32>
    %80 = arith.negf %79 : vector<4x32xf32>
    %81 = math.exp %80 : vector<4x32xf32>
    %cst_25 = arith.constant 1.000000e+00 : f32
    %82 = vector.broadcast %cst_25 : f32 to vector<4x32xf32>
    %83 = arith.addf %82, %81 : vector<4x32xf32>
    %84 = arith.divf %82, %83 : vector<4x32xf32>
    %85 = vector.extract_strided_slice %78 {offsets = [0, 32], sizes = [4, 32], strides = [1, 1]} : vector<4x128xf32> to vector<4x32xf32>
    %86 = arith.negf %85 : vector<4x32xf32>
    %87 = math.exp %86 : vector<4x32xf32>
    %cst_26 = arith.constant 1.000000e+00 : f32
    %88 = vector.broadcast %cst_26 : f32 to vector<4x32xf32>
    %89 = arith.addf %88, %87 : vector<4x32xf32>
    %90 = arith.divf %88, %89 : vector<4x32xf32>
    %91 = vector.extract_strided_slice %78 {offsets = [0, 64], sizes = [4, 32], strides = [1, 1]} : vector<4x128xf32> to vector<4x32xf32>
    %92 = math.tanh %91 : vector<4x32xf32>
    %93 = vector.extract_strided_slice %78 {offsets = [0, 96], sizes = [4, 32], strides = [1, 1]} : vector<4x128xf32> to vector<4x32xf32>
    %94 = arith.negf %93 : vector<4x32xf32>
    %95 = math.exp %94 : vector<4x32xf32>
    %cst_27 = arith.constant 1.000000e+00 : f32
    %96 = vector.broadcast %cst_27 : f32 to vector<4x32xf32>
    %97 = arith.addf %96, %95 : vector<4x32xf32>
    %98 = arith.divf %96, %97 : vector<4x32xf32>
    %99 = arith.mulf %90, %67 : vector<4x32xf32>
    %100 = arith.mulf %84, %92 : vector<4x32xf32>
    %101 = arith.addf %99, %100 : vector<4x32xf32>
    %102 = math.tanh %101 : vector<4x32xf32>
    %103 = arith.mulf %98, %102 : vector<4x32xf32>
    %104 = arith.index_cast %c2_i32 : i32 to index
    %c0_28 = arith.constant 0 : index
    %c0_29 = arith.constant 0 : index
    %105 = vector.load %arg5[%104, %c0_28, %c0_29] : memref<8x4x32xf32, #tpu.memory_space<vmem>>, vector<1x4x32xf32>
    %106 = vector.shape_cast %105 : vector<1x4x32xf32> to vector<4x32xf32>
    %107 = vector.shape_cast %103 : vector<4x32xf32> to vector<1x4x32xf32>
    tpu.vector_store %arg5[%104, %c0_28, %c0_29], %107 {strides = array<i32>} : memref<8x4x32xf32, #tpu.memory_space<vmem>>, vector<1x4x32xf32>,
    %c3_i32 = arith.constant 3 : i32
    %108 = arith.index_cast %c3_i32 : i32 to index
    %c0_30 = arith.constant 0 : index
    %c0_31 = arith.constant 0 : index
    %109 = vector.load %arg1[%108, %c0_30, %c0_31] : memref<8x4x128xf32, #tpu.memory_space<vmem>>, vector<1x4x128xf32>
    %110 = vector.shape_cast %109 : vector<1x4x128xf32> to vector<4x128xf32>
    %cst_32 = arith.constant dense<0.000000e+00> : vector<4x128xf32>
    %111 = tpu.matmul %103, %3, %cst_32 {dimension_numbers = #tpu.dot_dimension_numbers<[1], [0], [0], [1], [0, 0, 1, 1], [], []>} : vector<4x32xf32>, vector<32x128xf32>, vector<4x128xf32> -> vector<4x128xf32>
    %112 = arith.addf %110, %111 : vector<4x128xf32>
    %113 = vector.extract_strided_slice %112 {offsets = [0, 0], sizes = [4, 32], strides = [1, 1]} : vector<4x128xf32> to vector<4x32xf32>
    %114 = arith.negf %113 : vector<4x32xf32>
    %115 = math.exp %114 : vector<4x32xf32>
    %cst_33 = arith.constant 1.000000e+00 : f32
    %116 = vector.broadcast %cst_33 : f32 to vector<4x32xf32>
    %117 = arith.addf %116, %115 : vector<4x32xf32>
    %118 = arith.divf %116, %117 : vector<4x32xf32>
    %119 = vector.extract_strided_slice %112 {offsets = [0, 32], sizes = [4, 32], strides = [1, 1]} : vector<4x128xf32> to vector<4x32xf32>
    %120 = arith.negf %119 : vector<4x32xf32>
    %121 = math.exp %120 : vector<4x32xf32>
    %cst_34 = arith.constant 1.000000e+00 : f32
    %122 = vector.broadcast %cst_34 : f32 to vector<4x32xf32>
    %123 = arith.addf %122, %121 : vector<4x32xf32>
    %124 = arith.divf %122, %123 : vector<4x32xf32>
    %125 = vector.extract_strided_slice %112 {offsets = [0, 64], sizes = [4, 32], strides = [1, 1]} : vector<4x128xf32> to vector<4x32xf32>
    %126 = math.tanh %125 : vector<4x32xf32>
    %127 = vector.extract_strided_slice %112 {offsets = [0, 96], sizes = [4, 32], strides = [1, 1]} : vector<4x128xf32> to vector<4x32xf32>
    %128 = arith.negf %127 : vector<4x32xf32>
    %129 = math.exp %128 : vector<4x32xf32>
    %cst_35 = arith.constant 1.000000e+00 : f32
    %130 = vector.broadcast %cst_35 : f32 to vector<4x32xf32>
    %131 = arith.addf %130, %129 : vector<4x32xf32>
    %132 = arith.divf %130, %131 : vector<4x32xf32>
    %133 = arith.mulf %124, %101 : vector<4x32xf32>
    %134 = arith.mulf %118, %126 : vector<4x32xf32>
    %135 = arith.addf %133, %134 : vector<4x32xf32>
    %136 = math.tanh %135 : vector<4x32xf32>
    %137 = arith.mulf %132, %136 : vector<4x32xf32>
    %138 = arith.index_cast %c3_i32 : i32 to index
    %c0_36 = arith.constant 0 : index
    %c0_37 = arith.constant 0 : index
    %139 = vector.load %arg5[%138, %c0_36, %c0_37] : memref<8x4x32xf32, #tpu.memory_space<vmem>>, vector<1x4x32xf32>
    %140 = vector.shape_cast %139 : vector<1x4x32xf32> to vector<4x32xf32>
    %141 = vector.shape_cast %137 : vector<4x32xf32> to vector<1x4x32xf32>
    tpu.vector_store %arg5[%138, %c0_36, %c0_37], %141 {strides = array<i32>} : memref<8x4x32xf32, #tpu.memory_space<vmem>>, vector<1x4x32xf32>,
    %c4_i32 = arith.constant 4 : i32
    %142 = arith.index_cast %c4_i32 : i32 to index
    %c0_38 = arith.constant 0 : index
    %c0_39 = arith.constant 0 : index
    %143 = vector.load %arg1[%142, %c0_38, %c0_39] : memref<8x4x128xf32, #tpu.memory_space<vmem>>, vector<1x4x128xf32>
    %144 = vector.shape_cast %143 : vector<1x4x128xf32> to vector<4x128xf32>
    %cst_40 = arith.constant dense<0.000000e+00> : vector<4x128xf32>
    %145 = tpu.matmul %137, %3, %cst_40 {dimension_numbers = #tpu.dot_dimension_numbers<[1], [0], [0], [1], [0, 0, 1, 1], [], []>} : vector<4x32xf32>, vector<32x128xf32>, vector<4x128xf32> -> vector<4x128xf32>
    %146 = arith.addf %144, %145 : vector<4x128xf32>
    %147 = vector.extract_strided_slice %146 {offsets = [0, 0], sizes = [4, 32], strides = [1, 1]} : vector<4x128xf32> to vector<4x32xf32>
    %148 = arith.negf %147 : vector<4x32xf32>
    %149 = math.exp %148 : vector<4x32xf32>
    %cst_41 = arith.constant 1.000000e+00 : f32
    %150 = vector.broadcast %cst_41 : f32 to vector<4x32xf32>
    %151 = arith.addf %150, %149 : vector<4x32xf32>
    %152 = arith.divf %150, %151 : vector<4x32xf32>
    %153 = vector.extract_strided_slice %146 {offsets = [0, 32], sizes = [4, 32], strides = [1, 1]} : vector<4x128xf32> to vector<4x32xf32>
    %154 = arith.negf %153 : vector<4x32xf32>
    %155 = math.exp %154 : vector<4x32xf32>
    %cst_42 = arith.constant 1.000000e+00 : f32
    %156 = vector.broadcast %cst_42 : f32 to vector<4x32xf32>
    %157 = arith.addf %156, %155 : vector<4x32xf32>
    %158 = arith.divf %156, %157 : vector<4x32xf32>
    %159 = vector.extract_strided_slice %146 {offsets = [0, 64], sizes = [4, 32], strides = [1, 1]} : vector<4x128xf32> to vector<4x32xf32>
    %160 = math.tanh %159 : vector<4x32xf32>
    %161 = vector.extract_strided_slice %146 {offsets = [0, 96], sizes = [4, 32], strides = [1, 1]} : vector<4x128xf32> to vector<4x32xf32>
    %162 = arith.negf %161 : vector<4x32xf32>
    %163 = math.exp %162 : vector<4x32xf32>
    %cst_43 = arith.constant 1.000000e+00 : f32
    %164 = vector.broadcast %cst_43 : f32 to vector<4x32xf32>
    %165 = arith.addf %164, %163 : vector<4x32xf32>
    %166 = arith.divf %164, %165 : vector<4x32xf32>
    %167 = arith.mulf %158, %135 : vector<4x32xf32>
    %168 = arith.mulf %152, %160 : vector<4x32xf32>
    %169 = arith.addf %167, %168 : vector<4x32xf32>
    %170 = math.tanh %169 : vector<4x32xf32>
    %171 = arith.mulf %166, %170 : vector<4x32xf32>
    %172 = arith.index_cast %c4_i32 : i32 to index
    %c0_44 = arith.constant 0 : index
    %c0_45 = arith.constant 0 : index
    %173 = vector.load %arg5[%172, %c0_44, %c0_45] : memref<8x4x32xf32, #tpu.memory_space<vmem>>, vector<1x4x32xf32>
    %174 = vector.shape_cast %173 : vector<1x4x32xf32> to vector<4x32xf32>
    %175 = vector.shape_cast %171 : vector<4x32xf32> to vector<1x4x32xf32>
    tpu.vector_store %arg5[%172, %c0_44, %c0_45], %175 {strides = array<i32>} : memref<8x4x32xf32, #tpu.memory_space<vmem>>, vector<1x4x32xf32>,
    %c5_i32 = arith.constant 5 : i32
    %176 = arith.index_cast %c5_i32 : i32 to index
    %c0_46 = arith.constant 0 : index
    %c0_47 = arith.constant 0 : index
    %177 = vector.load %arg1[%176, %c0_46, %c0_47] : memref<8x4x128xf32, #tpu.memory_space<vmem>>, vector<1x4x128xf32>
    %178 = vector.shape_cast %177 : vector<1x4x128xf32> to vector<4x128xf32>
    %cst_48 = arith.constant dense<0.000000e+00> : vector<4x128xf32>
    %179 = tpu.matmul %171, %3, %cst_48 {dimension_numbers = #tpu.dot_dimension_numbers<[1], [0], [0], [1], [0, 0, 1, 1], [], []>} : vector<4x32xf32>, vector<32x128xf32>, vector<4x128xf32> -> vector<4x128xf32>
    %180 = arith.addf %178, %179 : vector<4x128xf32>
    %181 = vector.extract_strided_slice %180 {offsets = [0, 0], sizes = [4, 32], strides = [1, 1]} : vector<4x128xf32> to vector<4x32xf32>
    %182 = arith.negf %181 : vector<4x32xf32>
    %183 = math.exp %182 : vector<4x32xf32>
    %cst_49 = arith.constant 1.000000e+00 : f32
    %184 = vector.broadcast %cst_49 : f32 to vector<4x32xf32>
    %185 = arith.addf %184, %183 : vector<4x32xf32>
    %186 = arith.divf %184, %185 : vector<4x32xf32>
    %187 = vector.extract_strided_slice %180 {offsets = [0, 32], sizes = [4, 32], strides = [1, 1]} : vector<4x128xf32> to vector<4x32xf32>
    %188 = arith.negf %187 : vector<4x32xf32>
    %189 = math.exp %188 : vector<4x32xf32>
    %cst_50 = arith.constant 1.000000e+00 : f32
    %190 = vector.broadcast %cst_50 : f32 to vector<4x32xf32>
    %191 = arith.addf %190, %189 : vector<4x32xf32>
    %192 = arith.divf %190, %191 : vector<4x32xf32>
    %193 = vector.extract_strided_slice %180 {offsets = [0, 64], sizes = [4, 32], strides = [1, 1]} : vector<4x128xf32> to vector<4x32xf32>
    %194 = math.tanh %193 : vector<4x32xf32>
    %195 = vector.extract_strided_slice %180 {offsets = [0, 96], sizes = [4, 32], strides = [1, 1]} : vector<4x128xf32> to vector<4x32xf32>
    %196 = arith.negf %195 : vector<4x32xf32>
    %197 = math.exp %196 : vector<4x32xf32>
    %cst_51 = arith.constant 1.000000e+00 : f32
    %198 = vector.broadcast %cst_51 : f32 to vector<4x32xf32>
    %199 = arith.addf %198, %197 : vector<4x32xf32>
    %200 = arith.divf %198, %199 : vector<4x32xf32>
    %201 = arith.mulf %192, %169 : vector<4x32xf32>
    %202 = arith.mulf %186, %194 : vector<4x32xf32>
    %203 = arith.addf %201, %202 : vector<4x32xf32>
    %204 = math.tanh %203 : vector<4x32xf32>
    %205 = arith.mulf %200, %204 : vector<4x32xf32>
    %206 = arith.index_cast %c5_i32 : i32 to index
    %c0_52 = arith.constant 0 : index
    %c0_53 = arith.constant 0 : index
    %207 = vector.load %arg5[%206, %c0_52, %c0_53] : memref<8x4x32xf32, #tpu.memory_space<vmem>>, vector<1x4x32xf32>
    %208 = vector.shape_cast %207 : vector<1x4x32xf32> to vector<4x32xf32>
    %209 = vector.shape_cast %205 : vector<4x32xf32> to vector<1x4x32xf32>
    tpu.vector_store %arg5[%206, %c0_52, %c0_53], %209 {strides = array<i32>} : memref<8x4x32xf32, #tpu.memory_space<vmem>>, vector<1x4x32xf32>,
    %c6_i32 = arith.constant 6 : i32
    %210 = arith.index_cast %c6_i32 : i32 to index
    %c0_54 = arith.constant 0 : index
    %c0_55 = arith.constant 0 : index
    %211 = vector.load %arg1[%210, %c0_54, %c0_55] : memref<8x4x128xf32, #tpu.memory_space<vmem>>, vector<1x4x128xf32>
    %212 = vector.shape_cast %211 : vector<1x4x128xf32> to vector<4x128xf32>
    %cst_56 = arith.constant dense<0.000000e+00> : vector<4x128xf32>
    %213 = tpu.matmul %205, %3, %cst_56 {dimension_numbers = #tpu.dot_dimension_numbers<[1], [0], [0], [1], [0, 0, 1, 1], [], []>} : vector<4x32xf32>, vector<32x128xf32>, vector<4x128xf32> -> vector<4x128xf32>
    %214 = arith.addf %212, %213 : vector<4x128xf32>
    %215 = vector.extract_strided_slice %214 {offsets = [0, 0], sizes = [4, 32], strides = [1, 1]} : vector<4x128xf32> to vector<4x32xf32>
    %216 = arith.negf %215 : vector<4x32xf32>
    %217 = math.exp %216 : vector<4x32xf32>
    %cst_57 = arith.constant 1.000000e+00 : f32
    %218 = vector.broadcast %cst_57 : f32 to vector<4x32xf32>
    %219 = arith.addf %218, %217 : vector<4x32xf32>
    %220 = arith.divf %218, %219 : vector<4x32xf32>
    %221 = vector.extract_strided_slice %214 {offsets = [0, 32], sizes = [4, 32], strides = [1, 1]} : vector<4x128xf32> to vector<4x32xf32>
    %222 = arith.negf %221 : vector<4x32xf32>
    %223 = math.exp %222 : vector<4x32xf32>
    %cst_58 = arith.constant 1.000000e+00 : f32
    %224 = vector.broadcast %cst_58 : f32 to vector<4x32xf32>
    %225 = arith.addf %224, %223 : vector<4x32xf32>
    %226 = arith.divf %224, %225 : vector<4x32xf32>
    %227 = vector.extract_strided_slice %214 {offsets = [0, 64], sizes = [4, 32], strides = [1, 1]} : vector<4x128xf32> to vector<4x32xf32>
    %228 = math.tanh %227 : vector<4x32xf32>
    %229 = vector.extract_strided_slice %214 {offsets = [0, 96], sizes = [4, 32], strides = [1, 1]} : vector<4x128xf32> to vector<4x32xf32>
    %230 = arith.negf %229 : vector<4x32xf32>
    %231 = math.exp %230 : vector<4x32xf32>
    %cst_59 = arith.constant 1.000000e+00 : f32
    %232 = vector.broadcast %cst_59 : f32 to vector<4x32xf32>
    %233 = arith.addf %232, %231 : vector<4x32xf32>
    %234 = arith.divf %232, %233 : vector<4x32xf32>
    %235 = arith.mulf %226, %203 : vector<4x32xf32>
    %236 = arith.mulf %220, %228 : vector<4x32xf32>
    %237 = arith.addf %235, %236 : vector<4x32xf32>
    %238 = math.tanh %237 : vector<4x32xf32>
    %239 = arith.mulf %234, %238 : vector<4x32xf32>
    %240 = arith.index_cast %c6_i32 : i32 to index
    %c0_60 = arith.constant 0 : index
    %c0_61 = arith.constant 0 : index
    %241 = vector.load %arg5[%240, %c0_60, %c0_61] : memref<8x4x32xf32, #tpu.memory_space<vmem>>, vector<1x4x32xf32>
    %242 = vector.shape_cast %241 : vector<1x4x32xf32> to vector<4x32xf32>
    %243 = vector.shape_cast %239 : vector<4x32xf32> to vector<1x4x32xf32>
    tpu.vector_store %arg5[%240, %c0_60, %c0_61], %243 {strides = array<i32>} : memref<8x4x32xf32, #tpu.memory_space<vmem>>, vector<1x4x32xf32>,
    %c7_i32 = arith.constant 7 : i32
    %244 = arith.index_cast %c7_i32 : i32 to index
    %c0_62 = arith.constant 0 : index
    %c0_63 = arith.constant 0 : index
    %245 = vector.load %arg1[%244, %c0_62, %c0_63] : memref<8x4x128xf32, #tpu.memory_space<vmem>>, vector<1x4x128xf32>
    %246 = vector.shape_cast %245 : vector<1x4x128xf32> to vector<4x128xf32>
    %cst_64 = arith.constant dense<0.000000e+00> : vector<4x128xf32>
    %247 = tpu.matmul %239, %3, %cst_64 {dimension_numbers = #tpu.dot_dimension_numbers<[1], [0], [0], [1], [0, 0, 1, 1], [], []>} : vector<4x32xf32>, vector<32x128xf32>, vector<4x128xf32> -> vector<4x128xf32>
    %248 = arith.addf %246, %247 : vector<4x128xf32>
    %249 = vector.extract_strided_slice %248 {offsets = [0, 0], sizes = [4, 32], strides = [1, 1]} : vector<4x128xf32> to vector<4x32xf32>
    %250 = arith.negf %249 : vector<4x32xf32>
    %251 = math.exp %250 : vector<4x32xf32>
    %cst_65 = arith.constant 1.000000e+00 : f32
    %252 = vector.broadcast %cst_65 : f32 to vector<4x32xf32>
    %253 = arith.addf %252, %251 : vector<4x32xf32>
    %254 = arith.divf %252, %253 : vector<4x32xf32>
    %255 = vector.extract_strided_slice %248 {offsets = [0, 32], sizes = [4, 32], strides = [1, 1]} : vector<4x128xf32> to vector<4x32xf32>
    %256 = arith.negf %255 : vector<4x32xf32>
    %257 = math.exp %256 : vector<4x32xf32>
    %cst_66 = arith.constant 1.000000e+00 : f32
    %258 = vector.broadcast %cst_66 : f32 to vector<4x32xf32>
    %259 = arith.addf %258, %257 : vector<4x32xf32>
    %260 = arith.divf %258, %259 : vector<4x32xf32>
    %261 = vector.extract_strided_slice %248 {offsets = [0, 64], sizes = [4, 32], strides = [1, 1]} : vector<4x128xf32> to vector<4x32xf32>
    %262 = math.tanh %261 : vector<4x32xf32>
    %263 = vector.extract_strided_slice %248 {offsets = [0, 96], sizes = [4, 32], strides = [1, 1]} : vector<4x128xf32> to vector<4x32xf32>
    %264 = arith.negf %263 : vector<4x32xf32>
    %265 = math.exp %264 : vector<4x32xf32>
    %cst_67 = arith.constant 1.000000e+00 : f32
    %266 = vector.broadcast %cst_67 : f32 to vector<4x32xf32>
    %267 = arith.addf %266, %265 : vector<4x32xf32>
    %268 = arith.divf %266, %267 : vector<4x32xf32>
    %269 = arith.mulf %260, %237 : vector<4x32xf32>
    %270 = arith.mulf %254, %262 : vector<4x32xf32>
    %271 = arith.addf %269, %270 : vector<4x32xf32>
    %272 = math.tanh %271 : vector<4x32xf32>
    %273 = arith.mulf %268, %272 : vector<4x32xf32>
    %274 = arith.index_cast %c7_i32 : i32 to index
    %c0_68 = arith.constant 0 : index
    %c0_69 = arith.constant 0 : index
    %275 = vector.load %arg5[%274, %c0_68, %c0_69] : memref<8x4x32xf32, #tpu.memory_space<vmem>>, vector<1x4x32xf32>
    %276 = vector.shape_cast %275 : vector<1x4x32xf32> to vector<4x32xf32>
    %277 = vector.shape_cast %273 : vector<4x32xf32> to vector<1x4x32xf32>
    tpu.vector_store %arg5[%274, %c0_68, %c0_69], %277 {strides = array<i32>} : memref<8x4x32xf32, #tpu.memory_space<vmem>>, vector<1x4x32xf32>,
    %c8_i32 = arith.constant 8 : i32
    %c0_70 = arith.constant 0 : index
    %c0_71 = arith.constant 0 : index
    %278 = vector.load %arg8[%c0_70, %c0_71] : memref<4x32xf32, #tpu.memory_space<vmem>>, vector<4x32xf32>
    tpu.vector_store %arg8[%c0_70, %c0_71], %273 {strides = array<i32>} : memref<4x32xf32, #tpu.memory_space<vmem>>, vector<4x32xf32>,
    %c0_72 = arith.constant 0 : index
    %c0_73 = arith.constant 0 : index
    %279 = vector.load %arg9[%c0_72, %c0_73] : memref<4x32xf32, #tpu.memory_space<vmem>>, vector<4x32xf32>
    tpu.vector_store %arg9[%c0_72, %c0_73], %271 {strides = array<i32>} : memref<4x32xf32, #tpu.memory_space<vmem>>, vector<4x32xf32>,
    %c0_74 = arith.constant 0 : index
    %c0_75 = arith.constant 0 : index
    %280 = vector.load %arg6[%c0_74, %c0_75] : memref<4x32xf32, #tpu.memory_space<vmem>>, vector<4x32xf32>
    tpu.vector_store %arg6[%c0_74, %c0_75], %273 {strides = array<i32>} : memref<4x32xf32, #tpu.memory_space<vmem>>, vector<4x32xf32>,
    %c0_76 = arith.constant 0 : index
    %c0_77 = arith.constant 0 : index
    %281 = vector.load %arg7[%c0_76, %c0_77] : memref<4x32xf32, #tpu.memory_space<vmem>>, vector<4x32xf32>
    tpu.vector_store %arg7[%c0_76, %c0_77], %271 {strides = array<i32>} : memref<4x32xf32, #tpu.memory_space<vmem>>, vector<4x32xf32>,
    return
  }
  func.func @transform_0(%arg0: i32) -> (i32, i32, i32) {
    %c0_i32 = arith.constant 0 : i32
    %c0_i32_0 = arith.constant 0 : i32
    %c0_i32_1 = arith.constant 0 : i32
    return %arg0, %c0_i32, %c0_i32_0 : i32, i32, i32
  }
  func.func @transform_1(%arg0: i32) -> (i32, i32) {
    %c0_i32 = arith.constant 0 : i32
    %c0_i32_0 = arith.constant 0 : i32
    %c0_i32_1 = arith.constant 0 : i32
    return %c0_i32, %c0_i32_0 : i32, i32
  }
  func.func @transform_2(%arg0: i32) -> (i32, i32) {
    %c0_i32 = arith.constant 0 : i32
    %c0_i32_0 = arith.constant 0 : i32
    %c0_i32_1 = arith.constant 0 : i32
    return %c0_i32, %c0_i32_0 : i32, i32
  }
  func.func @transform_3(%arg0: i32) -> (i32, i32) {
    %c0_i32 = arith.constant 0 : i32
    %c0_i32_0 = arith.constant 0 : i32
    %c0_i32_1 = arith.constant 0 : i32
    return %c0_i32, %c0_i32_0 : i32, i32
  }
  func.func @transform_4(%arg0: i32) -> (i32, i32, i32) {
    %c0_i32 = arith.constant 0 : i32
    %c0_i32_0 = arith.constant 0 : i32
    %c0_i32_1 = arith.constant 0 : i32
    return %arg0, %c0_i32, %c0_i32_0 : i32, i32, i32
  }
  func.func @transform_5(%arg0: i32) -> (i32, i32) {
    %c0_i32 = arith.constant 0 : i32
    %c0_i32_0 = arith.constant 0 : i32
    %c0_i32_1 = arith.constant 0 : i32
    return %c0_i32, %c0_i32_0 : i32, i32
  }
  func.func @transform_6(%arg0: i32) -> (i32, i32) {
    %c0_i32 = arith.constant 0 : i32
    %c0_i32_0 = arith.constant 0 : i32
    %c0_i32_1 = arith.constant 0 : i32
    return %c0_i32, %c0_i32_0 : i32, i32
  }
}

</mosaic_0001>

<llo_original>
// kernel: tpu_custom_call.1
$region0: #{tpu_custom_call.1}
  #allocation0 [shape = 'u32[]', space=smem, size = 0x4, offset = 0x4, fixed_abs, tag = 'smem constant byte address 0x4 - core index']
  #allocation1 [shape = 'u32[144,128]{1,0:T(1,128)}', space=vmem, size = 0x12000, scoped, tag = 'internal scratch']
  #allocation2 [shape = 'f32[4,32]{1,0:T(4,128)}', space=vmem, size = 0x800, scoped, tag = 'scratch operand']
  #allocation3 [shape = 'f32[4,32]{1,0:T(4,128)}', space=vmem, size = 0x800, scoped, tag = 'scratch operand']
  %s0 = inlined_call_operand.hbm [shape: f32[8,4,128], index: 0, kind: input, shape index: {}]
  %s1 = inlined_call_operand.hbm [shape: f32[32,128], index: 1, kind: input, shape index: {}]
  %s2 = inlined_call_operand.vmem [shape: f32[4,32], index: 2, kind: input, shape index: {}]
  %s3 = inlined_call_operand.vmem [shape: f32[4,32], index: 3, kind: input, shape index: {}]
  %s4 = inlined_call_operand.hbm [shape: f32[8,4,32], index: 4, kind: output, shape index: {0}]
  %s5 = inlined_call_operand.hbm [shape: f32[4,32], index: 5, kind: output, shape index: {1}]
  %s6 = inlined_call_operand.hbm [shape: f32[4,32], index: 6, kind: output, shape index: {2}]
  %7 = xla_tuple %s4, %s5, %s6
  %s8 = sld [smem:[#allocation0]]
  $region54: #{tpu_custom_call.1} parent=0
    _
  %s10 = ssub.s32 1, %s8
  %s11 = scalar_select 0, %s10, %s8
  $region1: #{tpu_custom_call.1} parent=0
    #allocation4 [shape = 'u8[16384]{0}', space=vmem, size = 0x4000, scoped, tag = 'input window, operand 0, single buffered']
    #allocation5 [shape = 's32[1]{0}', space=sflag, size = 0x4, scoped, tag = 'scoped memory for tpu_custom_call.1']
    #allocation6 [shape = 's32[1]{0}', space=sflag, size = 0x4, scoped, tag = 'scoped memory for tpu_custom_call.1']
    #allocation7 [shape = 'u8[16384]{0}', space=vmem, size = 0x4000, scoped, tag = 'input window, operand 1, single buffered']
    #allocation8 [shape = 's32[1]{0}', space=sflag, size = 0x4, scoped, tag = 'scoped memory for tpu_custom_call.1']
    #allocation9 [shape = 'u8[16384]{0}', space=vmem, size = 0x4000, scoped, tag = 'output window, operand 0, single buffered']
    #allocation10 [shape = 'u8[2048]{0}', space=vmem, size = 0x800, scoped, tag = 'output window, operand 1, single buffered']
    #allocation11 [shape = 's32[1]{0}', space=sflag, size = 0x4, scoped, tag = 'scoped memory for tpu_custom_call.1']
    #allocation12 [shape = 'u8[2048]{0}', space=vmem, size = 0x800, scoped, tag = 'output window, operand 2, single buffered']
    %12 = vsyncpa [#allocation5], 0
    %13 = vsyncpa [#allocation8], 0
    %14 = vsyncpa [#allocation6], 0
    %15 = vsyncpa [#allocation11], 0
    // Predicated region
    $region2: #{tpu_custom_call.1} parent=1 // pred_check
      _
    $region3: #{tpu_custom_call.1} parent=1 // pred_check_branch
      %17 = sbr.rel (0) target = $region5
    $region4: #{tpu_custom_call.1} parent=1 // pred_region
      %s19 = ssub.s32 512, 512
      %20 = vsyncadd [#allocation5], %s19
      %s21 = sshll.u32 [#allocation4], 4
      %s22 = int_to_ptr.vmem [resolvable:$true] %s21
      %27 = dma.hbm_to_vmem [thread:$0]  %s0, 512, %s22, [#allocation5], 64, 64, 4
    $region5: #{tpu_custom_call.1} parent=1 // pred_fallthru
      _
    // Predicated region
    $region6: #{tpu_custom_call.1} parent=1 // pred_check
      _
    $region7: #{tpu_custom_call.1} parent=1 // pred_check_branch
      %29 = sbr.rel (0) target = $region9
    $region8: #{tpu_custom_call.1} parent=1 // pred_region
      %s31 = ssub.s32 512, 512
      %32 = vsyncadd [#allocation8], %s31
      %s33 = sshll.u32 [#allocation7], 4
      %s34 = int_to_ptr.vmem [resolvable:$true] %s33
      %39 = dma.hbm_to_vmem [thread:$0]  %s1, 512, %s34, [#allocation8], 128, 128, 8
    $region9: #{tpu_custom_call.1} parent=1 // pred_fallthru
      _
    // Predicated region
    $region10: #{tpu_custom_call.1} parent=1 // pred_check
      _
    $region11: #{tpu_custom_call.1} parent=1 // pred_check_branch
      %41 = sbr.rel (0) target = $region13
    $region12: #{tpu_custom_call.1} parent=1 // pred_region
      _
    $region13: #{tpu_custom_call.1} parent=1 // pred_fallthru
      _
    // Predicated region
    $region14: #{tpu_custom_call.1} parent=1 // pred_check
      _
    $region15: #{tpu_custom_call.1} parent=1 // pred_check_branch
      %43 = sbr.rel (0) target = $region17
    $region16: #{tpu_custom_call.1} parent=1 // pred_region
      _
    $region17: #{tpu_custom_call.1} parent=1 // pred_fallthru
      _
    // Predicated region
    $region18: #{tpu_custom_call.1} parent=1 // pred_check
      _
    $region19: #{tpu_custom_call.1} parent=1 // pred_check_branch
      %45 = sbr.rel (0) target = $region21
    $region20: #{tpu_custom_call.1} parent=1 // pred_region
      %46 = dma.done [#allocation5], 512
    $region21: #{tpu_custom_call.1} parent=1 // pred_fallthru
      _
    // Predicated region
    $region22: #{tpu_custom_call.1} parent=1 // pred_check
      _
    $region23: #{tpu_custom_call.1} parent=1 // pred_check_branch
      %48 = sbr.rel (0) target = $region25
    $region24: #{tpu_custom_call.1} parent=1 // pred_region
      %49 = dma.done [#allocation8], 512
    $region25: #{tpu_custom_call.1} parent=1 // pred_fallthru
      _
    %p50 = scmp.eq.s32.totalorder 0, 0
    // Predicated region
    $region26: #{tpu_custom_call.1} parent=1 // pred_check
      %p51 = pneg %p50
    $region27: #{tpu_custom_call.1} parent=1 // pred_check_branch
      %53 = sbr.rel (%p51) target = $region29
    $region28: #{tpu_custom_call.1} parent=1 // pred_region
      %v54 = vld [vmem:[%s2] sm:$0xf]
      %vm55 = vcmask 257024
      %56 = vst.msk [vmem:[#allocation2] sm:$0xf] %vm55, %v54
      %v57 = vld [vmem:[%s3] sm:$0xf]
      %58 = vst.msk [vmem:[#allocation3] sm:$0xf] %vm55, %v57
    $region29: #{tpu_custom_call.1} parent=1 // pred_fallthru
      _
    %v59 = vld [vmem:[#allocation7] sm:$0xff]
    %v60 = vld [vmem:[#allocation7 + $0x8] sm:$0xff]
    %v61 = vld [vmem:[#allocation7 + $0x10] sm:$0xff]
    %v62 = vld [vmem:[#allocation7 + $0x18] sm:$0xff]
    %v63 = vld [vmem:[#allocation2] sm:$0xf]
    %v64 = vld [vmem:[#allocation3] sm:$0xf]
    %v65 = vld [vmem:[#allocation4] sm:$0xf]
    %vm66 = vcmask 261120
    %v68 = vsel %vm66, %v63, 0
    %70 = vmatprep.subr.mxu0 0.0
    %71 = vmatpush1.msra.mxu0 %v59
    %72 = vmatprep.subr.mxu0 0.0
    %73 = vmatpush1.msra.mxu0 %v60
    %74 = vmatprep.subr.mxu0 0.0
    %75 = vmatpush1.msra.mxu0 %v61
    %76 = vmatprep.subr.mxu0 0.0
    %77 = vmatpush1.msra.mxu0 %v62
    %78 = vmatprep.subr.mxu0 0.0
    %79 = vmatpush1.msra.mxu0 0.0
    %80 = vmatprep.subr.mxu0 0.0
    %81 = vmatpush1.msra.mxu0 0.0
    %82 = vmatprep.subr.mxu0 0.0
    %83 = vmatpush1.msra.mxu0 0.0
    %84 = vmatprep.subr.mxu0 0.0
    %85 = vmatpush1.msra.mxu0 0.0
    %86 = vmatprep.subr.mxu0 0.0
    %87 = vmatpush1.msra.mxu0 0.0
    %88 = vmatprep.subr.mxu0 0.0
    %89 = vmatpush1.msra.mxu0 0.0
    %90 = vmatprep.subr.mxu0 0.0
    %91 = vmatpush1.msra.mxu0 0.0
    %92 = vmatprep.subr.mxu0 0.0
    %93 = vmatpush1.msra.mxu0 0.0
    %94 = vmatprep.subr.mxu0 0.0
    %95 = vmatpush1.msra.mxu0 0.0
    %96 = vmatprep.subr.mxu0 0.0
    %97 = vmatpush1.msra.mxu0 0.0
    %98 = vmatprep.subr.mxu0 0.0
    %99 = vmatpush1.msra.mxu0 0.0
    %100 = vmatprep.subr.mxu0 0.0
    %101 = vmatpush1.msra.mxu0 0.0
    %102 = vmatprep.subr.mxu0 0.0
    %103 = vmatpush1.msra.mxu0 0.0
    %104 = vmatprep.subr.mxu0 0.0
    %105 = vmatpush1.msra.mxu0 0.0
    %106 = vmatprep.subr.mxu0 0.0
    %107 = vmatpush1.msra.mxu0 0.0
    %108 = vmatprep.subr.mxu0 0.0
    %109 = vmatpush1.msra.mxu0 0.0
    %110 = vmatprep.subr.mxu0 0.0
    %111 = vmatpush1.msra.mxu0 0.0
    %112 = vmatprep.subr.mxu0 0.0
    %113 = vmatpush1.msra.mxu0 0.0
    %114 = vmatprep.subr.mxu0 0.0
    %115 = vmatpush1.msra.mxu0 0.0
    %116 = vmatprep.subr.mxu0 0.0
    %117 = vmatpush1.msra.mxu0 0.0
    %118 = vmatprep.subr.mxu0 0.0
    %119 = vmatpush1.msra.mxu0 0.0
    %120 = vmatprep.subr.mxu0 0.0
    %121 = vmatpush1.msra.mxu0 0.0
    %122 = vmatprep.subr.mxu0 0.0
    %123 = vmatpush1.msra.mxu0 0.0
    %124 = vmatprep.subr.mxu0 0.0
    %125 = vmatpush1.msra.mxu0 0.0
    %126 = vmatprep.subr.mxu0 0.0
    %127 = vmatpush1.msra.mxu0 0.0
    %128 = vmatprep.subr.mxu0 0.0
    %129 = vmatpush1.msra.mxu0 0.0
    %130 = vmatprep.subr.mxu0 0.0
    %131 = vmatpush1.msra.mxu0 0.0
    %132 = vmatprep.subr.mxu0 0.0
    %133 = vmatpush1.msra.mxu0 0.0
    %134 = vmatprep.mubr.f32.mxu0 0.0
    %135 = vmatmul.mubr.f32.gmra.mrb[0].mxu0 %v68
    %v136 = vpop.f32.mrb[0].mxu0
    %v137 = vadd.f32 0.0, %v136
    %v138 = vpop.f32.mrb[0].mxu0
    %139 = vdwg.mxu0
    %v140 = vadd.f32 %v65, %v137
    %v141 = vxor.u32 %v140, 2147483648
    %v142 = vmul.f32 %v141, 1.442695
    %v143 = vpow.pop %v142
    %v144 = vadd.f32 %v143, 1.0
    %v145 = vrcp.pop %v144
    %v146 = vmul.f32 1.0, %v145
    %v147 = vtanh.pop %v140
    %149 = vrot.lane.b32.xlu0 %v64, 32
    %v150 = vpop.permute.xlu0 %149
    %v152 = vmul.f32 %v146, %v150
    %154 = vrot.lane.b32.xlu0 %v147, 64
    %v155 = vpop.permute.xlu0 %154
    %v157 = vmul.f32 %v146, %v155
    %159 = vrot.lane.b32.xlu0 %v157, 32
    %v160 = vpop.permute.xlu0 %159
    %v162 = vadd.f32 %v152, %v160
    %v163 = vtanh.pop %v162
    %165 = vrot.lane.b32.xlu0 %v163, 64
    %v166 = vpop.permute.xlu0 %165
    %v168 = vmul.f32 %v146, %v166
    %170 = vrot.lane.b32.xlu0 %v168, 32
    %v171 = vpop.permute.xlu0 %170
    %vm173 = vcmask 257024
    %174 = vst.msk [vmem:[#allocation9] sm:$0xf] %vm173, %v171
    %s175 = scalar_lea.vmem [#allocation4], 4
    %v176 = vld [vmem:[%s175] sm:$0xf]
    %v177 = vsel %vm66, %v171, 0
    %179 = vmatprep.subr.mxu0 0.0
    %180 = vmatpush1.msra.mxu0 %v59
    %181 = vmatprep.subr.mxu0 0.0
    %182 = vmatpush1.msra.mxu0 %v60
    %183 = vmatprep.subr.mxu0 0.0
    %184 = vmatpush1.msra.mxu0 %v61
    %185 = vmatprep.subr.mxu0 0.0
    %186 = vmatpush1.msra.mxu0 %v62
    %187 = vmatprep.subr.mxu0 0.0
    %188 = vmatpush1.msra.mxu0 0.0
    %189 = vmatprep.subr.mxu0 0.0
    %190 = vmatpush1.msra.mxu0 0.0
    %191 = vmatprep.subr.mxu0 0.0
    %192 = vmatpush1.msra.mxu0 0.0
    %193 = vmatprep.subr.mxu0 0.0
    %194 = vmatpush1.msra.mxu0 0.0
    %195 = vmatprep.subr.mxu0 0.0
    %196 = vmatpush1.msra.mxu0 0.0
    %197 = vmatprep.subr.mxu0 0.0
    %198 = vmatpush1.msra.mxu0 0.0
    %199 = vmatprep.subr.mxu0 0.0
    %200 = vmatpush1.msra.mxu0 0.0
    %201 = vmatprep.subr.mxu0 0.0
    %202 = vmatpush1.msra.mxu0 0.0
    %203 = vmatprep.subr.mxu0 0.0
    %204 = vmatpush1.msra.mxu0 0.0
    %205 = vmatprep.subr.mxu0 0.0
    %206 = vmatpush1.msra.mxu0 0.0
    %207 = vmatprep.subr.mxu0 0.0
    %208 = vmatpush1.msra.mxu0 0.0
    %209 = vmatprep.subr.mxu0 0.0
    %210 = vmatpush1.msra.mxu0 0.0
    %211 = vmatprep.subr.mxu0 0.0
    %212 = vmatpush1.msra.mxu0 0.0
    %213 = vmatprep.subr.mxu0 0.0
    %214 = vmatpush1.msra.mxu0 0.0
    %215 = vmatprep.subr.mxu0 0.0
    %216 = vmatpush1.msra.mxu0 0.0
    %217 = vmatprep.subr.mxu0 0.0
    %218 = vmatpush1.msra.mxu0 0.0
    %219 = vmatprep.subr.mxu0 0.0
    %220 = vmatpush1.msra.mxu0 0.0
    %221 = vmatprep.subr.mxu0 0.0
    %222 = vmatpush1.msra.mxu0 0.0
    %223 = vmatprep.subr.mxu0 0.0
    %224 = vmatpush1.msra.mxu0 0.0
    %225 = vmatprep.subr.mxu0 0.0
    %226 = vmatpush1.msra.mxu0 0.0
    %227 = vmatprep.subr.mxu0 0.0
    %228 = vmatpush1.msra.mxu0 0.0
    %229 = vmatprep.subr.mxu0 0.0
    %230 = vmatpush1.msra.mxu0 0.0
    %231 = vmatprep.subr.mxu0 0.0
    %232 = vmatpush1.msra.mxu0 0.0
    %233 = vmatprep.subr.mxu0 0.0
    %234 = vmatpush1.msra.mxu0 0.0
    %235 = vmatprep.subr.mxu0 0.0
    %236 = vmatpush1.msra.mxu0 0.0
    %237 = vmatprep.subr.mxu0 0.0
    %238 = vmatpush1.msra.mxu0 0.0
    %239 = vmatprep.subr.mxu0 0.0
    %240 = vmatpush1.msra.mxu0 0.0
    %241 = vmatprep.subr.mxu0 0.0
    %242 = vmatpush1.msra.mxu0 0.0
    %243 = vmatprep.mubr.f32.mxu0 0.0
    %244 = vmatmul.mubr.f32.gmra.mrb[0].mxu0 %v177
    %v245 = vpop.f32.mrb[0].mxu0
    %v246 = vadd.f32 0.0, %v245
    %v247 = vpop.f32.mrb[0].mxu0
    %248 = vdwg.mxu0
    %v249 = vadd.f32 %v176, %v246
    %v250 = vxor.u32 %v249, 2147483648
    %v251 = vmul.f32 %v250, 1.442695
    %v252 = vpow.pop %v251
    %v253 = vadd.f32 %v252, 1.0
    %v254 = vrcp.pop %v253
    %v255 = vmul.f32 1.0, %v254
    %v256 = vtanh.pop %v249
    %v257 = vmul.f32 %v255, %v162
    %259 = vrot.lane.b32.xlu0 %v256, 64
    %v260 = vpop.permute.xlu0 %259
    %v262 = vmul.f32 %v255, %v260
    %264 = vrot.lane.b32.xlu0 %v262, 32
    %v265 = vpop.permute.xlu0 %264
    %v267 = vadd.f32 %v257, %v265
    %v268 = vtanh.pop %v267
    %270 = vrot.lane.b32.xlu0 %v268, 64
    %v271 = vpop.permute.xlu0 %270
    %v273 = vmul.f32 %v255, %v271
    %275 = vrot.lane.b32.xlu0 %v273, 32
    %v276 = vpop.permute.xlu0 %275
    %s278 = scalar_lea.vmem [#allocation9], 4
    %279 = vst.msk [vmem:[%s278] sm:$0xf] %vm173, %v276
    %s280 = scalar_lea.vmem [#allocation4], 8
    %v281 = vld [vmem:[%s280] sm:$0xf]
    %v282 = vsel %vm66, %v276, 0
    %284 = vmatprep.subr.mxu0 0.0
    %285 = vmatpush1.msra.mxu0 %v59
    %286 = vmatprep.subr.mxu0 0.0
    %287 = vmatpush1.msra.mxu0 %v60
    %288 = vmatprep.subr.mxu0 0.0
    %289 = vmatpush1.msra.mxu0 %v61
    %290 = vmatprep.subr.mxu0 0.0
    %291 = vmatpush1.msra.mxu0 %v62
    %292 = vmatprep.subr.mxu0 0.0
    %293 = vmatpush1.msra.mxu0 0.0
    %294 = vmatprep.subr.mxu0 0.0
    %295 = vmatpush1.msra.mxu0 0.0
    %296 = vmatprep.subr.mxu0 0.0
    %297 = vmatpush1.msra.mxu0 0.0
    %298 = vmatprep.subr.mxu0 0.0
    %299 = vmatpush1.msra.mxu0 0.0
    %300 = vmatprep.subr.mxu0 0.0
    %301 = vmatpush1.msra.mxu0 0.0
    %302 = vmatprep.subr.mxu0 0.0
    %303 = vmatpush1.msra.mxu0 0.0
    %304 = vmatprep.subr.mxu0 0.0
    %305 = vmatpush1.msra.mxu0 0.0
    %306 = vmatprep.subr.mxu0 0.0
    %307 = vmatpush1.msra.mxu0 0.0
    %308 = vmatprep.subr.mxu0 0.0
    %309 = vmatpush1.msra.mxu0 0.0
    %310 = vmatprep.subr.mxu0 0.0
    %311 = vmatpush1.msra.mxu0 0.0
    %312 = vmatprep.subr.mxu0 0.0
    %313 = vmatpush1.msra.mxu0 0.0
    %314 = vmatprep.subr.mxu0 0.0
    %315 = vmatpush1.msra.mxu0 0.0
    %316 = vmatprep.subr.mxu0 0.0
    %317 = vmatpush1.msra.mxu0 0.0
    %318 = vmatprep.subr.mxu0 0.0
    %319 = vmatpush1.msra.mxu0 0.0
    %320 = vmatprep.subr.mxu0 0.0
    %321 = vmatpush1.msra.mxu0 0.0
    %322 = vmatprep.subr.mxu0 0.0
    %323 = vmatpush1.msra.mxu0 0.0
    %324 = vmatprep.subr.mxu0 0.0
    %325 = vmatpush1.msra.mxu0 0.0
    %326 = vmatprep.subr.mxu0 0.0
    %327 = vmatpush1.msra.mxu0 0.0
    %328 = vmatprep.subr.mxu0 0.0
    %329 = vmatpush1.msra.mxu0 0.0
    %330 = vmatprep.subr.mxu0 0.0
    %331 = vmatpush1.msra.mxu0 0.0
    %332 = vmatprep.subr.mxu0 0.0
    %333 = vmatpush1.msra.mxu0 0.0
    %334 = vmatprep.subr.mxu0 0.0
    %335 = vmatpush1.msra.mxu0 0.0
    %336 = vmatprep.subr.mxu0 0.0
    %337 = vmatpush1.msra.mxu0 0.0
    %338 = vmatprep.subr.mxu0 0.0
    %339 = vmatpush1.msra.mxu0 0.0
    %340 = vmatprep.subr.mxu0 0.0
    %341 = vmatpush1.msra.mxu0 0.0
    %342 = vmatprep.subr.mxu0 0.0
    %343 = vmatpush1.msra.mxu0 0.0
    %344 = vmatprep.subr.mxu0 0.0
    %345 = vmatpush1.msra.mxu0 0.0
    %346 = vmatprep.subr.mxu0 0.0
    %347 = vmatpush1.msra.mxu0 0.0
    %348 = vmatprep.mubr.f32.mxu0 0.0
    %349 = vmatmul.mubr.f32.gmra.mrb[0].mxu0 %v282
    %v350 = vpop.f32.mrb[0].mxu0
    %v351 = vadd.f32 0.0, %v350
    %v352 = vpop.f32.mrb[0].mxu0
    %353 = vdwg.mxu0
    %v354 = vadd.f32 %v281, %v351
    %v355 = vxor.u32 %v354, 2147483648
    %v356 = vmul.f32 %v355, 1.442695
    %v357 = vpow.pop %v356
    %v358 = vadd.f32 %v357, 1.0
    %v359 = vrcp.pop %v358
    %v360 = vmul.f32 1.0, %v359
    %v361 = vtanh.pop %v354
    %v362 = vmul.f32 %v360, %v267
    %364 = vrot.lane.b32.xlu0 %v361, 64
    %v365 = vpop.permute.xlu0 %364
    %v367 = vmul.f32 %v360, %v365
    %369 = vrot.lane.b32.xlu0 %v367, 32
    %v370 = vpop.permute.xlu0 %369
    %v372 = vadd.f32 %v362, %v370
    %v373 = vtanh.pop %v372
    %375 = vrot.lane.b32.xlu0 %v373, 64
    %v376 = vpop.permute.xlu0 %375
    %v378 = vmul.f32 %v360, %v376
    %380 = vrot.lane.b32.xlu0 %v378, 32
    %v381 = vpop.permute.xlu0 %380
    %s383 = scalar_lea.vmem [#allocation9], 8
    %384 = vst.msk [vmem:[%s383] sm:$0xf] %vm173, %v381
    %s385 = scalar_lea.vmem [#allocation4], 12
    %v386 = vld [vmem:[%s385] sm:$0xf]
    %v387 = vsel %vm66, %v381, 0
    %389 = vmatprep.subr.mxu0 0.0
    %390 = vmatpush1.msra.mxu0 %v59
    %391 = vmatprep.subr.mxu0 0.0
    %392 = vmatpush1.msra.mxu0 %v60
    %393 = vmatprep.subr.mxu0 0.0
    %394 = vmatpush1.msra.mxu0 %v61
    %395 = vmatprep.subr.mxu0 0.0
    %396 = vmatpush1.msra.mxu0 %v62
    %397 = vmatprep.subr.mxu0 0.0
    %398 = vmatpush1.msra.mxu0 0.0
    %399 = vmatprep.subr.mxu0 0.0
    %400 = vmatpush1.msra.mxu0 0.0
    %401 = vmatprep.subr.mxu0 0.0
    %402 = vmatpush1.msra.mxu0 0.0
    %403 = vmatprep.subr.mxu0 0.0
    %404 = vmatpush1.msra.mxu0 0.0
    %405 = vmatprep.subr.mxu0 0.0
    %406 = vmatpush1.msra.mxu0 0.0
    %407 = vmatprep.subr.mxu0 0.0
    %408 = vmatpush1.msra.mxu0 0.0
    %409 = vmatprep.subr.mxu0 0.0
    %410 = vmatpush1.msra.mxu0 0.0
    %411 = vmatprep.subr.mxu0 0.0
    %412 = vmatpush1.msra.mxu0 0.0
    %413 = vmatprep.subr.mxu0 0.0
    %414 = vmatpush1.msra.mxu0 0.0
    %415 = vmatprep.subr.mxu0 0.0
    %416 = vmatpush1.msra.mxu0 0.0
    %417 = vmatprep.subr.mxu0 0.0
    %418 = vmatpush1.msra.mxu0 0.0
    %419 = vmatprep.subr.mxu0 0.0
    %420 = vmatpush1.msra.mxu0 0.0
    %421 = vmatprep.subr.mxu0 0.0
    %422 = vmatpush1.msra.mxu0 0.0
    %423 = vmatprep.subr.mxu0 0.0
    %424 = vmatpush1.msra.mxu0 0.0
    %425 = vmatprep.subr.mxu0 0.0
    %426 = vmatpush1.msra.mxu0 0.0
    %427 = vmatprep.subr.mxu0 0.0
    %428 = vmatpush1.msra.mxu0 0.0
    %429 = vmatprep.subr.mxu0 0.0
    %430 = vmatpush1.msra.mxu0 0.0
    %431 = vmatprep.subr.mxu0 0.0
    %432 = vmatpush1.msra.mxu0 0.0
    %433 = vmatprep.subr.mxu0 0.0
    %434 = vmatpush1.msra.mxu0 0.0
    %435 = vmatprep.subr.mxu0 0.0
    %436 = vmatpush1.msra.mxu0 0.0
    %437 = vmatprep.subr.mxu0 0.0
    %438 = vmatpush1.msra.mxu0 0.0
    %439 = vmatprep.subr.mxu0 0.0
    %440 = vmatpush1.msra.mxu0 0.0
    %441 = vmatprep.subr.mxu0 0.0
    %442 = vmatpush1.msra.mxu0 0.0
    %443 = vmatprep.subr.mxu0 0.0
    %444 = vmatpush1.msra.mxu0 0.0
    %445 = vmatprep.subr.mxu0 0.0
    %446 = vmatpush1.msra.mxu0 0.0
    %447 = vmatprep.subr.mxu0 0.0
    %448 = vmatpush1.msra.mxu0 0.0
    %449 = vmatprep.subr.mxu0 0.0
    %450 = vmatpush1.msra.mxu0 0.0
    %451 = vmatprep.subr.mxu0 0.0
    %452 = vmatpush1.msra.mxu0 0.0
    %453 = vmatprep.mubr.f32.mxu0 0.0
    %454 = vmatmul.mubr.f32.gmra.mrb[0].mxu0 %v387
    %v455 = vpop.f32.mrb[0].mxu0
    %v456 = vadd.f32 0.0, %v455
    %v457 = vpop.f32.mrb[0].mxu0
    %458 = vdwg.mxu0
    %v459 = vadd.f32 %v386, %v456
    %v460 = vxor.u32 %v459, 2147483648
    %v461 = vmul.f32 %v460, 1.442695
    %v462 = vpow.pop %v461
    %v463 = vadd.f32 %v462, 1.0
    %v464 = vrcp.pop %v463
    %v465 = vmul.f32 1.0, %v464
    %v466 = vtanh.pop %v459
    %v467 = vmul.f32 %v465, %v372
    %469 = vrot.lane.b32.xlu0 %v466, 64
    %v470 = vpop.permute.xlu0 %469
    %v472 = vmul.f32 %v465, %v470
    %474 = vrot.lane.b32.xlu0 %v472, 32
    %v475 = vpop.permute.xlu0 %474
    %v477 = vadd.f32 %v467, %v475
    %v478 = vtanh.pop %v477
    %480 = vrot.lane.b32.xlu0 %v478, 64
    %v481 = vpop.permute.xlu0 %480
    %v483 = vmul.f32 %v465, %v481
    %485 = vrot.lane.b32.xlu0 %v483, 32
    %v486 = vpop.permute.xlu0 %485
    %s488 = scalar_lea.vmem [#allocation9], 12
    %489 = vst.msk [vmem:[%s488] sm:$0xf] %vm173, %v486
    %s490 = scalar_lea.vmem [#allocation4], 16
    %v491 = vld [vmem:[%s490] sm:$0xf]
    %v492 = vsel %vm66, %v486, 0
    %494 = vmatprep.subr.mxu0 0.0
    %495 = vmatpush1.msra.mxu0 %v59
    %496 = vmatprep.subr.mxu0 0.0
    %497 = vmatpush1.msra.mxu0 %v60
    %498 = vmatprep.subr.mxu0 0.0
    %499 = vmatpush1.msra.mxu0 %v61
    %500 = vmatprep.subr.mxu0 0.0
    %501 = vmatpush1.msra.mxu0 %v62
    %502 = vmatprep.subr.mxu0 0.0
    %503 = vmatpush1.msra.mxu0 0.0
    %504 = vmatprep.subr.mxu0 0.0
    %505 = vmatpush1.msra.mxu0 0.0
    %506 = vmatprep.subr.mxu0 0.0
    %507 = vmatpush1.msra.mxu0 0.0
    %508 = vmatprep.subr.mxu0 0.0
    %509 = vmatpush1.msra.mxu0 0.0
    %510 = vmatprep.subr.mxu0 0.0
    %511 = vmatpush1.msra.mxu0 0.0
    %512 = vmatprep.subr.mxu0 0.0
    %513 = vmatpush1.msra.mxu0 0.0
    %514 = vmatprep.subr.mxu0 0.0
    %515 = vmatpush1.msra.mxu0 0.0
    %516 = vmatprep.subr.mxu0 0.0
    %517 = vmatpush1.msra.mxu0 0.0
    %518 = vmatprep.subr.mxu0 0.0
    %519 = vmatpush1.msra.mxu0 0.0
    %520 = vmatprep.subr.mxu0 0.0
    %521 = vmatpush1.msra.mxu0 0.0
    %522 = vmatprep.subr.mxu0 0.0
    %523 = vmatpush1.msra.mxu0 0.0
    %524 = vmatprep.subr.mxu0 0.0
    %525 = vmatpush1.msra.mxu0 0.0
    %526 = vmatprep.subr.mxu0 0.0
    %527 = vmatpush1.msra.mxu0 0.0
    %528 = vmatprep.subr.mxu0 0.0
    %529 = vmatpush1.msra.mxu0 0.0
    %530 = vmatprep.subr.mxu0 0.0
    %531 = vmatpush1.msra.mxu0 0.0
    %532 = vmatprep.subr.mxu0 0.0
    %533 = vmatpush1.msra.mxu0 0.0
    %534 = vmatprep.subr.mxu0 0.0
    %535 = vmatpush1.msra.mxu0 0.0
    %536 = vmatprep.subr.mxu0 0.0
    %537 = vmatpush1.msra.mxu0 0.0
    %538 = vmatprep.subr.mxu0 0.0
    %539 = vmatpush1.msra.mxu0 0.0
    %540 = vmatprep.subr.mxu0 0.0
    %541 = vmatpush1.msra.mxu0 0.0
    %542 = vmatprep.subr.mxu0 0.0
    %543 = vmatpush1.msra.mxu0 0.0
    %544 = vmatprep.subr.mxu0 0.0
    %545 = vmatpush1.msra.mxu0 0.0
    %546 = vmatprep.subr.mxu0 0.0
    %547 = vmatpush1.msra.mxu0 0.0
    %548 = vmatprep.subr.mxu0 0.0
    %549 = vmatpush1.msra.mxu0 0.0
    %550 = vmatprep.subr.mxu0 0.0
    %551 = vmatpush1.msra.mxu0 0.0
    %552 = vmatprep.subr.mxu0 0.0
    %553 = vmatpush1.msra.mxu0 0.0
    %554 = vmatprep.subr.mxu0 0.0
    %555 = vmatpush1.msra.mxu0 0.0
    %556 = vmatprep.subr.mxu0 0.0
    %557 = vmatpush1.msra.mxu0 0.0
    %558 = vmatprep.mubr.f32.mxu0 0.0
    %559 = vmatmul.mubr.f32.gmra.mrb[0].mxu0 %v492
    %v560 = vpop.f32.mrb[0].mxu0
    %v561 = vadd.f32 0.0, %v560
    %v562 = vpop.f32.mrb[0].mxu0
    %563 = vdwg.mxu0
    %v564 = vadd.f32 %v491, %v561
    %v565 = vxor.u32 %v564, 2147483648
    %v566 = vmul.f32 %v565, 1.442695
    %v567 = vpow.pop %v566
    %v568 = vadd.f32 %v567, 1.0
    %v569 = vrcp.pop %v568
    %v570 = vmul.f32 1.0, %v569
    %v571 = vtanh.pop %v564
    %v572 = vmul.f32 %v570, %v477
    %574 = vrot.lane.b32.xlu0 %v571, 64
    %v575 = vpop.permute.xlu0 %574
    %v577 = vmul.f32 %v570, %v575
    %579 = vrot.lane.b32.xlu0 %v577, 32
    %v580 = vpop.permute.xlu0 %579
    %v582 = vadd.f32 %v572, %v580
    %v583 = vtanh.pop %v582
    %585 = vrot.lane.b32.xlu0 %v583, 64
    %v586 = vpop.permute.xlu0 %585
    %v588 = vmul.f32 %v570, %v586
    %590 = vrot.lane.b32.xlu0 %v588, 32
    %v591 = vpop.permute.xlu0 %590
    %s593 = scalar_lea.vmem [#allocation9], 16
    %594 = vst.msk [vmem:[%s593] sm:$0xf] %vm173, %v591
    %s595 = scalar_lea.vmem [#allocation4], 20
    %v596 = vld [vmem:[%s595] sm:$0xf]
    %v597 = vsel %vm66, %v591, 0
    %599 = vmatprep.subr.mxu0 0.0
    %600 = vmatpush1.msra.mxu0 %v59
    %601 = vmatprep.subr.mxu0 0.0
    %602 = vmatpush1.msra.mxu0 %v60
    %603 = vmatprep.subr.mxu0 0.0
    %604 = vmatpush1.msra.mxu0 %v61
    %605 = vmatprep.subr.mxu0 0.0
    %606 = vmatpush1.msra.mxu0 %v62
    %607 = vmatprep.subr.mxu0 0.0
    %608 = vmatpush1.msra.mxu0 0.0
    %609 = vmatprep.subr.mxu0 0.0
    %610 = vmatpush1.msra.mxu0 0.0
    %611 = vmatprep.subr.mxu0 0.0
    %612 = vmatpush1.msra.mxu0 0.0
    %613 = vmatprep.subr.mxu0 0.0
    %614 = vmatpush1.msra.mxu0 0.0
    %615 = vmatprep.subr.mxu0 0.0
    %616 = vmatpush1.msra.mxu0 0.0
    %617 = vmatprep.subr.mxu0 0.0
    %618 = vmatpush1.msra.mxu0 0.0
    %619 = vmatprep.subr.mxu0 0.0
    %620 = vmatpush1.msra.mxu0 0.0
    %621 = vmatprep.subr.mxu0 0.0
    %622 = vmatpush1.msra.mxu0 0.0
    %623 = vmatprep.subr.mxu0 0.0
    %624 = vmatpush1.msra.mxu0 0.0
    %625 = vmatprep.subr.mxu0 0.0
    %626 = vmatpush1.msra.mxu0 0.0
    %627 = vmatprep.subr.mxu0 0.0
    %628 = vmatpush1.msra.mxu0 0.0
    %629 = vmatprep.subr.mxu0 0.0
    %630 = vmatpush1.msra.mxu0 0.0
    %631 = vmatprep.subr.mxu0 0.0
    %632 = vmatpush1.msra.mxu0 0.0
    %633 = vmatprep.subr.mxu0 0.0
    %634 = vmatpush1.msra.mxu0 0.0
    %635 = vmatprep.subr.mxu0 0.0
    %636 = vmatpush1.msra.mxu0 0.0
    %637 = vmatprep.subr.mxu0 0.0
    %638 = vmatpush1.msra.mxu0 0.0
    %639 = vmatprep.subr.mxu0 0.0
    %640 = vmatpush1.msra.mxu0 0.0
    %641 = vmatprep.subr.mxu0 0.0
    %642 = vmatpush1.msra.mxu0 0.0
    %643 = vmatprep.subr.mxu0 0.0
    %644 = vmatpush1.msra.mxu0 0.0
    %645 = vmatprep.subr.mxu0 0.0
    %646 = vmatpush1.msra.mxu0 0.0
    %647 = vmatprep.subr.mxu0 0.0
    %648 = vmatpush1.msra.mxu0 0.0
    %649 = vmatprep.subr.mxu0 0.0
    %650 = vmatpush1.msra.mxu0 0.0
    %651 = vmatprep.subr.mxu0 0.0
    %652 = vmatpush1.msra.mxu0 0.0
    %653 = vmatprep.subr.mxu0 0.0
    %654 = vmatpush1.msra.mxu0 0.0
    %655 = vmatprep.subr.mxu0 0.0
    %656 = vmatpush1.msra.mxu0 0.0
    %657 = vmatprep.subr.mxu0 0.0
    %658 = vmatpush1.msra.mxu0 0.0
    %659 = vmatprep.subr.mxu0 0.0
    %660 = vmatpush1.msra.mxu0 0.0
    %661 = vmatprep.subr.mxu0 0.0
    %662 = vmatpush1.msra.mxu0 0.0
    %663 = vmatprep.mubr.f32.mxu0 0.0
    %664 = vmatmul.mubr.f32.gmra.mrb[0].mxu0 %v597
    %v665 = vpop.f32.mrb[0].mxu0
    %v666 = vadd.f32 0.0, %v665
    %v667 = vpop.f32.mrb[0].mxu0
    %668 = vdwg.mxu0
    %v669 = vadd.f32 %v596, %v666
    %v670 = vxor.u32 %v669, 2147483648
    %v671 = vmul.f32 %v670, 1.442695
    %v672 = vpow.pop %v671
    %v673 = vadd.f32 %v672, 1.0
    %v674 = vrcp.pop %v673
    %v675 = vmul.f32 1.0, %v674
    %v676 = vtanh.pop %v669
    %v677 = vmul.f32 %v675, %v582
    %679 = vrot.lane.b32.xlu0 %v676, 64
    %v680 = vpop.permute.xlu0 %679
    %v682 = vmul.f32 %v675, %v680
    %684 = vrot.lane.b32.xlu0 %v682, 32
    %v685 = vpop.permute.xlu0 %684
    %v687 = vadd.f32 %v677, %v685
    %v688 = vtanh.pop %v687
    %690 = vrot.lane.b32.xlu0 %v688, 64
    %v691 = vpop.permute.xlu0 %690
    %v693 = vmul.f32 %v675, %v691
    %695 = vrot.lane.b32.xlu0 %v693, 32
    %v696 = vpop.permute.xlu0 %695
    %s698 = scalar_lea.vmem [#allocation9], 20
    %699 = vst.msk [vmem:[%s698] sm:$0xf] %vm173, %v696
    %s700 = scalar_lea.vmem [#allocation4], 24
    %v701 = vld [vmem:[%s700] sm:$0xf]
    %v702 = vsel %vm66, %v696, 0
    %704 = vmatprep.subr.mxu0 0.0
    %705 = vmatpush1.msra.mxu0 %v59
    %706 = vmatprep.subr.mxu0 0.0
    %707 = vmatpush1.msra.mxu0 %v60
    %708 = vmatprep.subr.mxu0 0.0
    %709 = vmatpush1.msra.mxu0 %v61
    %710 = vmatprep.subr.mxu0 0.0
    %711 = vmatpush1.msra.mxu0 %v62
    %712 = vmatprep.subr.mxu0 0.0
    %713 = vmatpush1.msra.mxu0 0.0
    %714 = vmatprep.subr.mxu0 0.0
    %715 = vmatpush1.msra.mxu0 0.0
    %716 = vmatprep.subr.mxu0 0.0
    %717 = vmatpush1.msra.mxu0 0.0
    %718 = vmatprep.subr.mxu0 0.0
    %719 = vmatpush1.msra.mxu0 0.0
    %720 = vmatprep.subr.mxu0 0.0
    %721 = vmatpush1.msra.mxu0 0.0
    %722 = vmatprep.subr.mxu0 0.0
    %723 = vmatpush1.msra.mxu0 0.0
    %724 = vmatprep.subr.mxu0 0.0
    %725 = vmatpush1.msra.mxu0 0.0
    %726 = vmatprep.subr.mxu0 0.0
    %727 = vmatpush1.msra.mxu0 0.0
    %728 = vmatprep.subr.mxu0 0.0
    %729 = vmatpush1.msra.mxu0 0.0
    %730 = vmatprep.subr.mxu0 0.0
    %731 = vmatpush1.msra.mxu0 0.0
    %732 = vmatprep.subr.mxu0 0.0
    %733 = vmatpush1.msra.mxu0 0.0
    %734 = vmatprep.subr.mxu0 0.0
    %735 = vmatpush1.msra.mxu0 0.0
    %736 = vmatprep.subr.mxu0 0.0
    %737 = vmatpush1.msra.mxu0 0.0
    %738 = vmatprep.subr.mxu0 0.0
    %739 = vmatpush1.msra.mxu0 0.0
    %740 = vmatprep.subr.mxu0 0.0
    %741 = vmatpush1.msra.mxu0 0.0
    %742 = vmatprep.subr.mxu0 0.0
    %743 = vmatpush1.msra.mxu0 0.0
    %744 = vmatprep.subr.mxu0 0.0
    %745 = vmatpush1.msra.mxu0 0.0
    %746 = vmatprep.subr.mxu0 0.0
    %747 = vmatpush1.msra.mxu0 0.0
    %748 = vmatprep.subr.mxu0 0.0
    %749 = vmatpush1.msra.mxu0 0.0
    %750 = vmatprep.subr.mxu0 0.0
    %751 = vmatpush1.msra.mxu0 0.0
    %752 = vmatprep.subr.mxu0 0.0
    %753 = vmatpush1.msra.mxu0 0.0
    %754 = vmatprep.subr.mxu0 0.0
    %755 = vmatpush1.msra.mxu0 0.0
    %756 = vmatprep.subr.mxu0 0.0
    %757 = vmatpush1.msra.mxu0 0.0
    %758 = vmatprep.subr.mxu0 0.0
    %759 = vmatpush1.msra.mxu0 0.0
    %760 = vmatprep.subr.mxu0 0.0
    %761 = vmatpush1.msra.mxu0 0.0
    %762 = vmatprep.subr.mxu0 0.0
    %763 = vmatpush1.msra.mxu0 0.0
    %764 = vmatprep.subr.mxu0 0.0
    %765 = vmatpush1.msra.mxu0 0.0
    %766 = vmatprep.subr.mxu0 0.0
    %767 = vmatpush1.msra.mxu0 0.0
    %768 = vmatprep.mubr.f32.mxu0 0.0
    %769 = vmatmul.mubr.f32.gmra.mrb[0].mxu0 %v702
    %v770 = vpop.f32.mrb[0].mxu0
    %v771 = vadd.f32 0.0, %v770
    %v772 = vpop.f32.mrb[0].mxu0
    %773 = vdwg.mxu0
    %v774 = vadd.f32 %v701, %v771
    %v775 = vxor.u32 %v774, 2147483648
    %v776 = vmul.f32 %v775, 1.442695
    %v777 = vpow.pop %v776
    %v778 = vadd.f32 %v777, 1.0
    %v779 = vrcp.pop %v778
    %v780 = vmul.f32 1.0, %v779
    %v781 = vtanh.pop %v774
    %v782 = vmul.f32 %v780, %v687
    %784 = vrot.lane.b32.xlu0 %v781, 64
    %v785 = vpop.permute.xlu0 %784
    %v787 = vmul.f32 %v780, %v785
    %789 = vrot.lane.b32.xlu0 %v787, 32
    %v790 = vpop.permute.xlu0 %789
    %v792 = vadd.f32 %v782, %v790
    %v793 = vtanh.pop %v792
    %795 = vrot.lane.b32.xlu0 %v793, 64
    %v796 = vpop.permute.xlu0 %795
    %v798 = vmul.f32 %v780, %v796
    %800 = vrot.lane.b32.xlu0 %v798, 32
    %v801 = vpop.permute.xlu0 %800
    %s803 = scalar_lea.vmem [#allocation9], 24
    %804 = vst.msk [vmem:[%s803] sm:$0xf] %vm173, %v801
    %s805 = scalar_lea.vmem [#allocation4], 28
    %v806 = vld [vmem:[%s805] sm:$0xf]
    %v807 = vsel %vm66, %v801, 0
    %809 = vmatprep.subr.mxu0 0.0
    %810 = vmatpush1.msra.mxu0 %v59
    %811 = vmatprep.subr.mxu0 0.0
    %812 = vmatpush1.msra.mxu0 %v60
    %813 = vmatprep.subr.mxu0 0.0
    %814 = vmatpush1.msra.mxu0 %v61
    %815 = vmatprep.subr.mxu0 0.0
    %816 = vmatpush1.msra.mxu0 %v62
    %817 = vmatprep.subr.mxu0 0.0
    %818 = vmatpush1.msra.mxu0 0.0
    %819 = vmatprep.subr.mxu0 0.0
    %820 = vmatpush1.msra.mxu0 0.0
    %821 = vmatprep.subr.mxu0 0.0
    %822 = vmatpush1.msra.mxu0 0.0
    %823 = vmatprep.subr.mxu0 0.0
    %824 = vmatpush1.msra.mxu0 0.0
    %825 = vmatprep.subr.mxu0 0.0
    %826 = vmatpush1.msra.mxu0 0.0
    %827 = vmatprep.subr.mxu0 0.0
    %828 = vmatpush1.msra.mxu0 0.0
    %829 = vmatprep.subr.mxu0 0.0
    %830 = vmatpush1.msra.mxu0 0.0
    %831 = vmatprep.subr.mxu0 0.0
    %832 = vmatpush1.msra.mxu0 0.0
    %833 = vmatprep.subr.mxu0 0.0
    %834 = vmatpush1.msra.mxu0 0.0
    %835 = vmatprep.subr.mxu0 0.0
    %836 = vmatpush1.msra.mxu0 0.0
    %837 = vmatprep.subr.mxu0 0.0
    %838 = vmatpush1.msra.mxu0 0.0
    %839 = vmatprep.subr.mxu0 0.0
    %840 = vmatpush1.msra.mxu0 0.0
    %841 = vmatprep.subr.mxu0 0.0
    %842 = vmatpush1.msra.mxu0 0.0
    %843 = vmatprep.subr.mxu0 0.0
    %844 = vmatpush1.msra.mxu0 0.0
    %845 = vmatprep.subr.mxu0 0.0
    %846 = vmatpush1.msra.mxu0 0.0
    %847 = vmatprep.subr.mxu0 0.0
    %848 = vmatpush1.msra.mxu0 0.0
    %849 = vmatprep.subr.mxu0 0.0
    %850 = vmatpush1.msra.mxu0 0.0
    %851 = vmatprep.subr.mxu0 0.0
    %852 = vmatpush1.msra.mxu0 0.0
    %853 = vmatprep.subr.mxu0 0.0
    %854 = vmatpush1.msra.mxu0 0.0
    %855 = vmatprep.subr.mxu0 0.0
    %856 = vmatpush1.msra.mxu0 0.0
    %857 = vmatprep.subr.mxu0 0.0
    %858 = vmatpush1.msra.mxu0 0.0
    %859 = vmatprep.subr.mxu0 0.0
    %860 = vmatpush1.msra.mxu0 0.0
    %861 = vmatprep.subr.mxu0 0.0
    %862 = vmatpush1.msra.mxu0 0.0
    %863 = vmatprep.subr.mxu0 0.0
    %864 = vmatpush1.msra.mxu0 0.0
    %865 = vmatprep.subr.mxu0 0.0
    %866 = vmatpush1.msra.mxu0 0.0
    %867 = vmatprep.subr.mxu0 0.0
    %868 = vmatpush1.msra.mxu0 0.0
    %869 = vmatprep.subr.mxu0 0.0
    %870 = vmatpush1.msra.mxu0 0.0
    %871 = vmatprep.subr.mxu0 0.0
    %872 = vmatpush1.msra.mxu0 0.0
    %873 = vmatprep.mubr.f32.mxu0 0.0
    %874 = vmatmul.mubr.f32.gmra.mrb[0].mxu0 %v807
    %v875 = vpop.f32.mrb[0].mxu0
    %v876 = vadd.f32 0.0, %v875
    %v877 = vpop.f32.mrb[0].mxu0
    %878 = vdwg.mxu0
    %v879 = vadd.f32 %v806, %v876
    %v880 = vxor.u32 %v879, 2147483648
    %v881 = vmul.f32 %v880, 1.442695
    %v882 = vpow.pop %v881
    %v883 = vadd.f32 %v882, 1.0
    %v884 = vrcp.pop %v883
    %v885 = vmul.f32 1.0, %v884
    %v886 = vtanh.pop %v879
    %v887 = vmul.f32 %v885, %v792
    %889 = vrot.lane.b32.xlu0 %v886, 64
    %v890 = vpop.permute.xlu0 %889
    %v892 = vmul.f32 %v885, %v890
    %894 = vrot.lane.b32.xlu0 %v892, 32
    %v895 = vpop.permute.xlu0 %894
    %v897 = vadd.f32 %v887, %v895
    %v898 = vtanh.pop %v897
    %900 = vrot.lane.b32.xlu0 %v898, 64
    %v901 = vpop.permute.xlu0 %900
    %v903 = vmul.f32 %v885, %v901
    %905 = vrot.lane.b32.xlu0 %v903, 32
    %v906 = vpop.permute.xlu0 %905
    %s908 = scalar_lea.vmem [#allocation9], 28
    %909 = vst.msk [vmem:[%s908] sm:$0xf] %vm173, %v906
    %910 = vst.msk [vmem:[#allocation2] sm:$0xf] %vm173, %v906
    %912 = vrot.lane.b32.xlu0 %v897, 96
    %v913 = vpop.permute.xlu0 %912
    %915 = vst.msk [vmem:[#allocation3] sm:$0xf] %vm173, %v913
    %916 = vst.msk [vmem:[#allocation10] sm:$0xf] %vm173, %v906
    %917 = vst.msk [vmem:[#allocation12] sm:$0xf] %vm173, %v913
    // Predicated region
    $region30: #{tpu_custom_call.1} parent=1 // pred_check
      _
    $region31: #{tpu_custom_call.1} parent=1 // pred_check_branch
      %919 = sbr.rel (0) target = $region33
    $region32: #{tpu_custom_call.1} parent=1 // pred_region
      %s921 = ssub.s32 512, 512
      %922 = vsyncadd [#allocation6], %s921
      %s923 = sshll.u32 [#allocation9], 4
      %s924 = int_to_ptr.vmem [resolvable:$true] %s923
      %929 = dma.vmem_to_hbm [thread:$0]  %s924, 512, %s4, [#allocation6], 64, 64, 4
    $region33: #{tpu_custom_call.1} parent=1 // pred_fallthru
      _
    // Predicated region
    $region34: #{tpu_custom_call.1} parent=1 // pred_check
      _
    $region35: #{tpu_custom_call.1} parent=1 // pred_check_branch
      %931 = sbr.rel (0) target = $region37
    $region36: #{tpu_custom_call.1} parent=1 // pred_region
      %s933 = ssub.s32 64, 64
      %934 = vsyncadd [#allocation11], %s933
      %s936 = sshll.u32 [#allocation10], 4
      %s937 = int_to_ptr.vmem [resolvable:$true] %s936
      %939 = dma.vmem_to_hbm [thread:$0]  %s937, 64, %s5, [#allocation11]
    $region37: #{tpu_custom_call.1} parent=1 // pred_fallthru
      _
    // Predicated region
    $region38: #{tpu_custom_call.1} parent=1 // pred_check
      _
    $region39: #{tpu_custom_call.1} parent=1 // pred_check_branch
      %941 = sbr.rel (0) target = $region41
    $region40: #{tpu_custom_call.1} parent=1 // pred_region
      %s943 = ssub.s32 64, 64
      %944 = vsyncadd [#allocation11], %s943
      %s946 = sshll.u32 [#allocation12], 4
      %s947 = int_to_ptr.vmem [resolvable:$true] %s946
      %949 = dma.vmem_to_hbm [thread:$0]  %s947, 64, %s6, [#allocation11]
    $region41: #{tpu_custom_call.1} parent=1 // pred_fallthru
      _
    // Predicated region
    $region42: #{tpu_custom_call.1} parent=1 // pred_check
      _
    $region43: #{tpu_custom_call.1} parent=1 // pred_check_branch
      %951 = sbr.rel (0) target = $region45
    $region44: #{tpu_custom_call.1} parent=1 // pred_region
      %952 = dma.done [#allocation6], 512
    $region45: #{tpu_custom_call.1} parent=1 // pred_fallthru
      _
    // Predicated region
    $region46: #{tpu_custom_call.1} parent=1 // pred_check
      _
    $region47: #{tpu_custom_call.1} parent=1 // pred_check_branch
      %954 = sbr.rel (0) target = $region49
    $region48: #{tpu_custom_call.1} parent=1 // pred_region
      %955 = dma.done [#allocation11], 64
    $region49: #{tpu_custom_call.1} parent=1 // pred_fallthru
      _
    // Predicated region
    $region50: #{tpu_custom_call.1} parent=1 // pred_check
      _
    $region51: #{tpu_custom_call.1} parent=1 // pred_check_branch
      %957 = sbr.rel (0) target = $region53
    $region52: #{tpu_custom_call.1} parent=1 // pred_region
      %958 = dma.done [#allocation11], 64
    $region53: #{tpu_custom_call.1} parent=1 // pred_fallthru
      _
    %959 = vsyncpa [#allocation5], 1
    %960 = vsyncpa [#allocation8], 1
    %961 = vsyncpa [#allocation6], 1
    %962 = vsyncpa [#allocation11], 1

</llo_original>
